<compile_context>
chip_gen: v6e
topology: v6e:2x2x1
jax: 0.10.0
libtpu: 0.0.40
codegen_flags: <defaults>
</compile_context>

<pallas_src>
import functools
import math

import jax
import jax.numpy as jnp
from jax import lax
from jax.experimental import pallas as pl
from jax.experimental.pallas import tpu as pltpu


# ----------------------------------------------------------------------------
# Fused kernel: per (batch, q-tile) grid point
#   q_all = Q[b] @ Wq^T ; k_all = K[b] @ Wk^T ; v_all = V[b] @ Wv^T
#   for each head h:  out += softmax_mask(q_h k_h^T / sqrt(dh)) v_h @ Wo_h
# ----------------------------------------------------------------------------
def _mha_fused_kernel(vl_ref, q_ref, k_ref, v_ref,
                      wqt_ref, wkt_ref, wvt_ref, wot_ref,
                      o_ref, *, num_heads, head_dim):
    b = pl.program_id(0)

    scale = jnp.float32(1.0 / math.sqrt(head_dim))

    # All-head projections: N = num_hidden keeps the MXU columns full.
    q_all = jnp.dot(q_ref[...], wqt_ref[...],
                    preferred_element_type=jnp.float32) * scale
    k_all = jnp.dot(k_ref[...], wkt_ref[...],
                    preferred_element_type=jnp.float32)
    v_all = jnp.dot(v_ref[...], wvt_ref[...],
                    preferred_element_type=jnp.float32)

    tq = q_all.shape[0]
    sk = k_all.shape[0]

    # Per-batch key mask (shared by every head of this batch, i.e. the
    # torch.repeat_interleave over heads).  -1e6 matches d2l's masked_softmax.
    vl = vl_ref[b]
    key_idx = lax.broadcasted_iota(jnp.int32, (tq, sk), 1)
    mask = key_idx < vl

    acc = jnp.zeros(o_ref.shape, jnp.float32)
    for h in range(num_heads):           # small, static head count -> unrolled
        lo = h * head_dim
        hi = lo + head_dim
        q_h = q_all[:, lo:hi]
        k_h = k_all[:, lo:hi]
        v_h = v_all[:, lo:hi]

        # (tq, dh) x (sk, dh) -> (tq, sk), contracting last dims (no k.T).
        scores = lax.dot_general(q_h, k_h, (((1,), (1,)), ((), ())),
                                 preferred_element_type=jnp.float32)
        scores = jnp.where(mask, scores, jnp.float32(-1e6))
        scores = scores - jnp.max(scores, axis=-1, keepdims=True)
        p = jnp.exp(scores)
        attn = p * pl.reciprocal(jnp.sum(p, axis=-1, keepdims=True), approx=True)

        ctx = jnp.dot(attn, v_h, preferred_element_type=jnp.float32)  # (tq, dh)
        # Fused output projection: Wo_h = Wo^T[lo:hi, :]  (dh, num_hidden).
        acc = acc + jnp.dot(ctx, wot_ref[pl.ds(lo, head_dim), :],
                            preferred_element_type=jnp.float32)

    o_ref[...] = acc.astype(o_ref.dtype)


def multihead_attention(queries, keys, values, valid_lens, params, num_heads,
                        block_q=256):
    """params = (Wq, Wk, Wv, Wo), each in PyTorch nn.Linear layout (out, in)."""
    Wq, Wk, Wv, Wo = params
    B, Sq, Dq = queries.shape
    _, Sk, Dk = keys.shape
    _, _, Dv = values.shape
    H = num_heads
    num_hidden = Wq.shape[0]
    dh = num_hidden // H

    if valid_lens is None:
        valid_lens = jnp.full((B,), Sk, dtype=jnp.int32)
    valid_lens = valid_lens.astype(jnp.int32)

    # Transposed weights (ideally cached at parameter-load time).
    WqT = Wq.T          # (Dq, num_hidden)
    WkT = Wk.T          # (Dk, num_hidden)
    WvT = Wv.T          # (Dv, num_hidden)
    WoT = Wo.T          # (num_hidden, num_hidden)

    tq = min(Sq, block_q)
    if Sq % tq != 0:
        tq = Sq
    n_q_tiles = Sq // tq

    kernel = functools.partial(_mha_fused_kernel, num_heads=H, head_dim=dh)

    out = pl.pallas_call(
        kernel,
        out_shape=jax.ShapeDtypeStruct((B, Sq, num_hidden), queries.dtype),
        grid_spec=pltpu.PrefetchScalarGridSpec(
            num_scalar_prefetch=1,
            grid=(B, n_q_tiles),
            in_specs=[
                # Activations: K/V block index ignores the q-tile axis, so the
                # blocks stay resident across the inner grid axis (no re-DMA).
                pl.BlockSpec((None, tq, Dq), lambda b, qi, vl: (b, qi, 0)),
                pl.BlockSpec((None, Sk, Dk), lambda b, qi, vl: (b, 0, 0)),
                pl.BlockSpec((None, Sk, Dv), lambda b, qi, vl: (b, 0, 0)),
                # Weights: constant block index -> loaded once, stay resident.
                pl.BlockSpec((Dq, num_hidden), lambda b, qi, vl: (0, 0)),
                pl.BlockSpec((Dk, num_hidden), lambda b, qi, vl: (0, 0)),
                pl.BlockSpec((Dv, num_hidden), lambda b, qi, vl: (0, 0)),
                pl.BlockSpec((num_hidden, num_hidden), lambda b, qi, vl: (0, 0)),
            ],
            out_specs=pl.BlockSpec((None, tq, num_hidden),
                                   lambda b, qi, vl: (b, qi, 0)),
        ),
        compiler_params=pltpu.CompilerParams(
            dimension_semantics=("parallel", "parallel"),
            vmem_limit_bytes=32 * 1024 * 1024,
        ),
    )(valid_lens, queries, keys, values, WqT, WkT, WvT, WoT)

    return out


# ----------------------------------------------------------------------------
# Pure-JAX reference (mirrors the PyTorch forward exactly), used for checking.
# ----------------------------------------------------------------------------
def _reference(queries, keys, values, valid_lens, params, num_heads):
    Wq, Wk, Wv, Wo = params
    H = num_heads
    num_hidden = Wq.shape[0]
    dh = num_hidden // H

    def t_qkv(x):  # transpose_qkv
        x = x.reshape(x.shape[0], x.shape[1], H, -1).transpose(0, 2, 1, 3)
        return x.reshape(-1, x.shape[2], x.shape[3])

    q = t_qkv(queries @ Wq.T)
    k = t_qkv(keys @ Wk.T)
    v = t_qkv(values @ Wv.T)
    vl = jnp.repeat(valid_lens, H, axis=0)  # (B*H,)

    scores = jnp.einsum("bqd,bkd->bqk", q, k) / math.sqrt(dh)
    key_idx = jnp.arange(scores.shape[-1])[None, None, :]
    scores = jnp.where(key_idx < vl[:, None, None], scores, -1e6)
    attn = jax.nn.softmax(scores, axis=-1)
    out = jnp.einsum("bqk,bkd->bqd", attn, v)

    out = out.reshape(-1, H, out.shape[1], out.shape[2]).transpose(0, 2, 1, 3)
    out = out.reshape(out.shape[0], out.shape[1], -1)
    return out @ Wo.T


if __name__ == "__main__":
    # Small shapes consistent with the module's forward.
    batch, seq = 2, 8
    key_size = query_size = value_size = 16
    num_hidden, num_heads = 32, 4

    key = jax.random.PRNGKey(0)
    ks = jax.random.split(key, 8)

    def linear_init(k, out_f, in_f):
        bound = 1.0 / math.sqrt(in_f)  # PyTorch nn.Linear default init range
        return jax.random.uniform(k, (out_f, in_f), jnp.float32, -bound, bound)

    Wq = linear_init(ks[0], num_hidden, query_size)
    Wk = linear_init(ks[1], num_hidden, key_size)
    Wv = linear_init(ks[2], num_hidden, value_size)
    Wo = linear_init(ks[3], num_hidden, num_hidden)
    params = (Wq, Wk, Wv, Wo)

    queries = jax.random.normal(ks[4], (batch, seq, query_size), jnp.float32)
    keys = jax.random.normal(ks[5], (batch, seq, key_size), jnp.float32)
    values = jax.random.normal(ks[6], (batch, seq, value_size), jnp.float32)
    valid_lens = jnp.array([3, 6], dtype=jnp.int32)

    out = multihead_attention(queries, keys, values, valid_lens, params, num_heads)
    out = jax.block_until_ready(out)

    ref = _reference(queries, keys, values, valid_lens, params, num_heads)
    assert out.shape == (batch, seq, num_hidden)
    # approx reciprocal in the softmax denominator -> allow ~1e-3 slack.
    assert jnp.allclose(out, ref, atol=2e-3, rtol=2e-3), "mismatch vs reference"

    print("KERNEL_OK")
</pallas_src>

<mosaic_0001>
module attributes {stable_mosaic.version = 11 : i64} {
  func.func @_mha_fused_kernel(%arg0: i32, %arg1: i32, %arg2: memref<2xi32, #tpu.memory_space<smem>>, %arg3: memref<1x8x16xf32, #tpu.memory_space<vmem>>, %arg4: memref<1x8x16xf32, #tpu.memory_space<vmem>>, %arg5: memref<1x8x16xf32, #tpu.memory_space<vmem>>, %arg6: memref<16x32xf32, #tpu.memory_space<vmem>>, %arg7: memref<16x32xf32, #tpu.memory_space<vmem>>, %arg8: memref<16x32xf32, #tpu.memory_space<vmem>>, %arg9: memref<32x32xf32, #tpu.memory_space<vmem>>, %arg10: memref<1x8x32xf32, #tpu.memory_space<vmem>>) attributes {dimension_semantics = [#tpu.dimension_semantics<parallel>, #tpu.dimension_semantics<parallel>], iteration_bounds = array<i64: 2, 1>, scalar_prefetch = 1 : i64, scratch_operands = 0 : i64, tpu.core_type = #tpu.core_type<tc>, window_params = [{transform_indices = @transform_0, window_bounds = array<i64: 1, 8, 16>}, {transform_indices = @transform_1, window_bounds = array<i64: 1, 8, 16>}, {transform_indices = @transform_2, window_bounds = array<i64: 1, 8, 16>}, {pipeline_mode = #tpu.pipeline_mode<synchronous>, transform_indices = @transform_3, window_bounds = array<i64: 16, 32>}, {pipeline_mode = #tpu.pipeline_mode<synchronous>, transform_indices = @transform_4, window_bounds = array<i64: 16, 32>}, {pipeline_mode = #tpu.pipeline_mode<synchronous>, transform_indices = @transform_5, window_bounds = array<i64: 16, 32>}, {pipeline_mode = #tpu.pipeline_mode<synchronous>, transform_indices = @transform_6, window_bounds = array<i64: 32, 32>}, {transform_indices = @transform_7, window_bounds = array<i64: 1, 8, 32>}]} {
    %c0 = arith.constant 0 : index
    %c0_0 = arith.constant 0 : index
    %c0_1 = arith.constant 0 : index
    %0 = vector.load %arg3[%c0, %c0_0, %c0_1] : memref<1x8x16xf32, #tpu.memory_space<vmem>>, vector<1x8x16xf32>
    %1 = vector.shape_cast %0 : vector<1x8x16xf32> to vector<8x16xf32>
    %c0_2 = arith.constant 0 : index
    %c0_3 = arith.constant 0 : index
    %2 = vector.load %arg6[%c0_2, %c0_3] : memref<16x32xf32, #tpu.memory_space<vmem>>, vector<16x32xf32>
    %cst = arith.constant dense<0.000000e+00> : vector<8x32xf32>
    %3 = tpu.matmul %1, %2, %cst {dimension_numbers = #tpu.dot_dimension_numbers<[1], [0], [0], [1], [0, 0, 1, 1], [], []>} : vector<8x16xf32>, vector<16x32xf32>, vector<8x32xf32> -> vector<8x32xf32>
    %cst_4 = arith.constant 0.353553385 : f32
    %4 = vector.broadcast %cst_4 : f32 to vector<8x32xf32>
    %5 = arith.mulf %3, %4 : vector<8x32xf32>
    %c0_5 = arith.constant 0 : index
    %c0_6 = arith.constant 0 : index
    %c0_7 = arith.constant 0 : index
    %6 = vector.load %arg4[%c0_5, %c0_6, %c0_7] : memref<1x8x16xf32, #tpu.memory_space<vmem>>, vector<1x8x16xf32>
    %7 = vector.shape_cast %6 : vector<1x8x16xf32> to vector<8x16xf32>
    %c0_8 = arith.constant 0 : index
    %c0_9 = arith.constant 0 : index
    %8 = vector.load %arg7[%c0_8, %c0_9] : memref<16x32xf32, #tpu.memory_space<vmem>>, vector<16x32xf32>
    %cst_10 = arith.constant dense<0.000000e+00> : vector<8x32xf32>
    %9 = tpu.matmul %7, %8, %cst_10 {dimension_numbers = #tpu.dot_dimension_numbers<[1], [0], [0], [1], [0, 0, 1, 1], [], []>} : vector<8x16xf32>, vector<16x32xf32>, vector<8x32xf32> -> vector<8x32xf32>
    %c0_11 = arith.constant 0 : index
    %c0_12 = arith.constant 0 : index
    %c0_13 = arith.constant 0 : index
    %10 = vector.load %arg5[%c0_11, %c0_12, %c0_13] : memref<1x8x16xf32, #tpu.memory_space<vmem>>, vector<1x8x16xf32>
    %11 = vector.shape_cast %10 : vector<1x8x16xf32> to vector<8x16xf32>
    %c0_14 = arith.constant 0 : index
    %c0_15 = arith.constant 0 : index
    %12 = vector.load %arg8[%c0_14, %c0_15] : memref<16x32xf32, #tpu.memory_space<vmem>>, vector<16x32xf32>
    %cst_16 = arith.constant dense<0.000000e+00> : vector<8x32xf32>
    %13 = tpu.matmul %11, %12, %cst_16 {dimension_numbers = #tpu.dot_dimension_numbers<[1], [0], [0], [1], [0, 0, 1, 1], [], []>} : vector<8x16xf32>, vector<16x32xf32>, vector<8x32xf32> -> vector<8x32xf32>
    %14 = arith.index_cast %arg0 : i32 to index
    %15 = memref.load %arg2[%14] : memref<2xi32, #tpu.memory_space<smem>>
    %16 = tpu.iota {dimensions = array<i32: 1>} : vector<8x8xi32>
    %17 = vector.broadcast %15 : i32 to vector<8x8xi32>
    %18 = arith.cmpi slt, %16, %17 : vector<8x8xi32>
    %cst_17 = arith.constant 0.000000e+00 : f32
    %19 = vector.broadcast %cst_17 : f32 to vector<8x32xf32>
    %20 = vector.extract_strided_slice %5 {offsets = [0, 0], sizes = [8, 8], strides = [1, 1]} : vector<8x32xf32> to vector<8x8xf32>
    %21 = vector.extract_strided_slice %9 {offsets = [0, 0], sizes = [8, 8], strides = [1, 1]} : vector<8x32xf32> to vector<8x8xf32>
    %22 = vector.extract_strided_slice %13 {offsets = [0, 0], sizes = [8, 8], strides = [1, 1]} : vector<8x32xf32> to vector<8x8xf32>
    %cst_18 = arith.constant dense<0.000000e+00> : vector<8x8xf32>
    %23 = tpu.matmul %20, %21, %cst_18 {dimension_numbers = #tpu.dot_dimension_numbers<[1], [1], [0], [0], [0, 0, 1, 0], [], []>} : vector<8x8xf32>, vector<8x8xf32>, vector<8x8xf32> -> vector<8x8xf32>
    %cst_19 = arith.constant -1.000000e+06 : f32
    %24 = vector.broadcast %cst_19 : f32 to vector<8x8xf32>
    %25 = arith.select %18, %23, %24 : vector<8x8xi1>, vector<8x8xf32>
    %cst_20 = arith.constant dense<0xFF800000> : vector<8xf32>
    %26 = vector.multi_reduction <maximumf>, %25, %cst_20 [1] : vector<8x8xf32> to vector<8xf32>
    %27 = vector.shape_cast %26 : vector<8xf32> to vector<8x1xf32>
    %28 = vector.broadcast %27 : vector<8x1xf32> to vector<8x8xf32>
    %29 = arith.subf %25, %28 : vector<8x8xf32>
    %30 = math.exp %29 : vector<8x8xf32>
    %cst_21 = arith.constant dense<0.000000e+00> : vector<8xf32>
    %31 = vector.multi_reduction <add>, %30, %cst_21 [1] : vector<8x8xf32> to vector<8xf32>
    %32 = vector.shape_cast %31 : vector<8xf32> to vector<8x1xf32>
    %33 = tpu.reciprocal %32 {approx = true} : vector<8x1xf32> -> vector<8x1xf32>
    %34 = vector.broadcast %33 : vector<8x1xf32> to vector<8x8xf32>
    %35 = arith.mulf %30, %34 : vector<8x8xf32>
    %cst_22 = arith.constant dense<0.000000e+00> : vector<8x8xf32>
    %36 = tpu.matmul %35, %22, %cst_22 {dimension_numbers = #tpu.dot_dimension_numbers<[1], [0], [0], [1], [0, 0, 1, 1], [], []>} : vector<8x8xf32>, vector<8x8xf32>, vector<8x8xf32> -> vector<8x8xf32>
    %c0_23 = arith.constant 0 : index
    %c0_24 = arith.constant 0 : index
    %37 = vector.load %arg9[%c0_23, %c0_24] : memref<32x32xf32, #tpu.memory_space<vmem>>, vector<8x32xf32>
    %cst_25 = arith.constant dense<0.000000e+00> : vector<8x32xf32>
    %38 = tpu.matmul %36, %37, %cst_25 {dimension_numbers = #tpu.dot_dimension_numbers<[1], [0], [0], [1], [0, 0, 1, 1], [], []>} : vector<8x8xf32>, vector<8x32xf32>, vector<8x32xf32> -> vector<8x32xf32>
    %39 = arith.addf %19, %38 : vector<8x32xf32>
    %40 = vector.extract_strided_slice %5 {offsets = [0, 8], sizes = [8, 8], strides = [1, 1]} : vector<8x32xf32> to vector<8x8xf32>
    %41 = vector.extract_strided_slice %9 {offsets = [0, 8], sizes = [8, 8], strides = [1, 1]} : vector<8x32xf32> to vector<8x8xf32>
    %42 = vector.extract_strided_slice %13 {offsets = [0, 8], sizes = [8, 8], strides = [1, 1]} : vector<8x32xf32> to vector<8x8xf32>
    %cst_26 = arith.constant dense<0.000000e+00> : vector<8x8xf32>
    %43 = tpu.matmul %40, %41, %cst_26 {dimension_numbers = #tpu.dot_dimension_numbers<[1], [1], [0], [0], [0, 0, 1, 0], [], []>} : vector<8x8xf32>, vector<8x8xf32>, vector<8x8xf32> -> vector<8x8xf32>
    %cst_27 = arith.constant -1.000000e+06 : f32
    %44 = vector.broadcast %cst_27 : f32 to vector<8x8xf32>
    %45 = arith.select %18, %43, %44 : vector<8x8xi1>, vector<8x8xf32>
    %cst_28 = arith.constant dense<0xFF800000> : vector<8xf32>
    %46 = vector.multi_reduction <maximumf>, %45, %cst_28 [1] : vector<8x8xf32> to vector<8xf32>
    %47 = vector.shape_cast %46 : vector<8xf32> to vector<8x1xf32>
    %48 = vector.broadcast %47 : vector<8x1xf32> to vector<8x8xf32>
    %49 = arith.subf %45, %48 : vector<8x8xf32>
    %50 = math.exp %49 : vector<8x8xf32>
    %cst_29 = arith.constant dense<0.000000e+00> : vector<8xf32>
    %51 = vector.multi_reduction <add>, %50, %cst_29 [1] : vector<8x8xf32> to vector<8xf32>
    %52 = vector.shape_cast %51 : vector<8xf32> to vector<8x1xf32>
    %53 = tpu.reciprocal %52 {approx = true} : vector<8x1xf32> -> vector<8x1xf32>
    %54 = vector.broadcast %53 : vector<8x1xf32> to vector<8x8xf32>
    %55 = arith.mulf %50, %54 : vector<8x8xf32>
    %cst_30 = arith.constant dense<0.000000e+00> : vector<8x8xf32>
    %56 = tpu.matmul %55, %42, %cst_30 {dimension_numbers = #tpu.dot_dimension_numbers<[1], [0], [0], [1], [0, 0, 1, 1], [], []>} : vector<8x8xf32>, vector<8x8xf32>, vector<8x8xf32> -> vector<8x8xf32>
    %c8 = arith.constant 8 : index
    %c0_31 = arith.constant 0 : index
    %57 = vector.load %arg9[%c8, %c0_31] : memref<32x32xf32, #tpu.memory_space<vmem>>, vector<8x32xf32>
    %cst_32 = arith.constant dense<0.000000e+00> : vector<8x32xf32>
    %58 = tpu.matmul %56, %57, %cst_32 {dimension_numbers = #tpu.dot_dimension_numbers<[1], [0], [0], [1], [0, 0, 1, 1], [], []>} : vector<8x8xf32>, vector<8x32xf32>, vector<8x32xf32> -> vector<8x32xf32>
    %59 = arith.addf %39, %58 : vector<8x32xf32>
    %60 = vector.extract_strided_slice %5 {offsets = [0, 16], sizes = [8, 8], strides = [1, 1]} : vector<8x32xf32> to vector<8x8xf32>
    %61 = vector.extract_strided_slice %9 {offsets = [0, 16], sizes = [8, 8], strides = [1, 1]} : vector<8x32xf32> to vector<8x8xf32>
    %62 = vector.extract_strided_slice %13 {offsets = [0, 16], sizes = [8, 8], strides = [1, 1]} : vector<8x32xf32> to vector<8x8xf32>
    %cst_33 = arith.constant dense<0.000000e+00> : vector<8x8xf32>
    %63 = tpu.matmul %60, %61, %cst_33 {dimension_numbers = #tpu.dot_dimension_numbers<[1], [1], [0], [0], [0, 0, 1, 0], [], []>} : vector<8x8xf32>, vector<8x8xf32>, vector<8x8xf32> -> vector<8x8xf32>
    %cst_34 = arith.constant -1.000000e+06 : f32
    %64 = vector.broadcast %cst_34 : f32 to vector<8x8xf32>
    %65 = arith.select %18, %63, %64 : vector<8x8xi1>, vector<8x8xf32>
    %cst_35 = arith.constant dense<0xFF800000> : vector<8xf32>
    %66 = vector.multi_reduction <maximumf>, %65, %cst_35 [1] : vector<8x8xf32> to vector<8xf32>
    %67 = vector.shape_cast %66 : vector<8xf32> to vector<8x1xf32>
    %68 = vector.broadcast %67 : vector<8x1xf32> to vector<8x8xf32>
    %69 = arith.subf %65, %68 : vector<8x8xf32>
    %70 = math.exp %69 : vector<8x8xf32>
    %cst_36 = arith.constant dense<0.000000e+00> : vector<8xf32>
    %71 = vector.multi_reduction <add>, %70, %cst_36 [1] : vector<8x8xf32> to vector<8xf32>
    %72 = vector.shape_cast %71 : vector<8xf32> to vector<8x1xf32>
    %73 = tpu.reciprocal %72 {approx = true} : vector<8x1xf32> -> vector<8x1xf32>
    %74 = vector.broadcast %73 : vector<8x1xf32> to vector<8x8xf32>
    %75 = arith.mulf %70, %74 : vector<8x8xf32>
    %cst_37 = arith.constant dense<0.000000e+00> : vector<8x8xf32>
    %76 = tpu.matmul %75, %62, %cst_37 {dimension_numbers = #tpu.dot_dimension_numbers<[1], [0], [0], [1], [0, 0, 1, 1], [], []>} : vector<8x8xf32>, vector<8x8xf32>, vector<8x8xf32> -> vector<8x8xf32>
    %c16 = arith.constant 16 : index
    %c0_38 = arith.constant 0 : index
    %77 = vector.load %arg9[%c16, %c0_38] : memref<32x32xf32, #tpu.memory_space<vmem>>, vector<8x32xf32>
    %cst_39 = arith.constant dense<0.000000e+00> : vector<8x32xf32>
    %78 = tpu.matmul %76, %77, %cst_39 {dimension_numbers = #tpu.dot_dimension_numbers<[1], [0], [0], [1], [0, 0, 1, 1], [], []>} : vector<8x8xf32>, vector<8x32xf32>, vector<8x32xf32> -> vector<8x32xf32>
    %79 = arith.addf %59, %78 : vector<8x32xf32>
    %80 = vector.extract_strided_slice %5 {offsets = [0, 24], sizes = [8, 8], strides = [1, 1]} : vector<8x32xf32> to vector<8x8xf32>
    %81 = vector.extract_strided_slice %9 {offsets = [0, 24], sizes = [8, 8], strides = [1, 1]} : vector<8x32xf32> to vector<8x8xf32>
    %82 = vector.extract_strided_slice %13 {offsets = [0, 24], sizes = [8, 8], strides = [1, 1]} : vector<8x32xf32> to vector<8x8xf32>
    %cst_40 = arith.constant dense<0.000000e+00> : vector<8x8xf32>
    %83 = tpu.matmul %80, %81, %cst_40 {dimension_numbers = #tpu.dot_dimension_numbers<[1], [1], [0], [0], [0, 0, 1, 0], [], []>} : vector<8x8xf32>, vector<8x8xf32>, vector<8x8xf32> -> vector<8x8xf32>
    %cst_41 = arith.constant -1.000000e+06 : f32
    %84 = vector.broadcast %cst_41 : f32 to vector<8x8xf32>
    %85 = arith.select %18, %83, %84 : vector<8x8xi1>, vector<8x8xf32>
    %cst_42 = arith.constant dense<0xFF800000> : vector<8xf32>
    %86 = vector.multi_reduction <maximumf>, %85, %cst_42 [1] : vector<8x8xf32> to vector<8xf32>
    %87 = vector.shape_cast %86 : vector<8xf32> to vector<8x1xf32>
    %88 = vector.broadcast %87 : vector<8x1xf32> to vector<8x8xf32>
    %89 = arith.subf %85, %88 : vector<8x8xf32>
    %90 = math.exp %89 : vector<8x8xf32>
    %cst_43 = arith.constant dense<0.000000e+00> : vector<8xf32>
    %91 = vector.multi_reduction <add>, %90, %cst_43 [1] : vector<8x8xf32> to vector<8xf32>
    %92 = vector.shape_cast %91 : vector<8xf32> to vector<8x1xf32>
    %93 = tpu.reciprocal %92 {approx = true} : vector<8x1xf32> -> vector<8x1xf32>
    %94 = vector.broadcast %93 : vector<8x1xf32> to vector<8x8xf32>
    %95 = arith.mulf %90, %94 : vector<8x8xf32>
    %cst_44 = arith.constant dense<0.000000e+00> : vector<8x8xf32>
    %96 = tpu.matmul %95, %82, %cst_44 {dimension_numbers = #tpu.dot_dimension_numbers<[1], [0], [0], [1], [0, 0, 1, 1], [], []>} : vector<8x8xf32>, vector<8x8xf32>, vector<8x8xf32> -> vector<8x8xf32>
    %c24 = arith.constant 24 : index
    %c0_45 = arith.constant 0 : index
    %97 = vector.load %arg9[%c24, %c0_45] : memref<32x32xf32, #tpu.memory_space<vmem>>, vector<8x32xf32>
    %cst_46 = arith.constant dense<0.000000e+00> : vector<8x32xf32>
    %98 = tpu.matmul %96, %97, %cst_46 {dimension_numbers = #tpu.dot_dimension_numbers<[1], [0], [0], [1], [0, 0, 1, 1], [], []>} : vector<8x8xf32>, vector<8x32xf32>, vector<8x32xf32> -> vector<8x32xf32>
    %99 = arith.addf %79, %98 : vector<8x32xf32>
    %c0_47 = arith.constant 0 : index
    %c0_48 = arith.constant 0 : index
    %c0_49 = arith.constant 0 : index
    %100 = vector.load %arg10[%c0_47, %c0_48, %c0_49] : memref<1x8x32xf32, #tpu.memory_space<vmem>>, vector<1x8x32xf32>
    %101 = vector.shape_cast %100 : vector<1x8x32xf32> to vector<8x32xf32>
    %102 = vector.shape_cast %99 : vector<8x32xf32> to vector<1x8x32xf32>
    tpu.vector_store %arg10[%c0_47, %c0_48, %c0_49], %102 {strides = array<i32>} : memref<1x8x32xf32, #tpu.memory_space<vmem>>, vector<1x8x32xf32>,
    return
  }
  func.func @transform_0(%arg0: i32, %arg1: i32, %arg2: memref<2xi32, #tpu.memory_space<smem>>) -> (i32, i32, i32) {
    %c0_i32 = arith.constant 0 : i32
    %c0_i32_0 = arith.constant 0 : i32
    return %arg0, %arg1, %c0_i32 : i32, i32, i32
  }
  func.func @transform_1(%arg0: i32, %arg1: i32, %arg2: memref<2xi32, #tpu.memory_space<smem>>) -> (i32, i32, i32) {
    %c0_i32 = arith.constant 0 : i32
    %c0_i32_0 = arith.constant 0 : i32
    %c0_i32_1 = arith.constant 0 : i32
    return %arg0, %c0_i32, %c0_i32_0 : i32, i32, i32
  }
  func.func @transform_2(%arg0: i32, %arg1: i32, %arg2: memref<2xi32, #tpu.memory_space<smem>>) -> (i32, i32, i32) {
    %c0_i32 = arith.constant 0 : i32
    %c0_i32_0 = arith.constant 0 : i32
    %c0_i32_1 = arith.constant 0 : i32
    return %arg0, %c0_i32, %c0_i32_0 : i32, i32, i32
  }
  func.func @transform_3(%arg0: i32, %arg1: i32, %arg2: memref<2xi32, #tpu.memory_space<smem>>) -> (i32, i32) {
    %c0_i32 = arith.constant 0 : i32
    %c0_i32_0 = arith.constant 0 : i32
    %c0_i32_1 = arith.constant 0 : i32
    return %c0_i32, %c0_i32_0 : i32, i32
  }
  func.func @transform_4(%arg0: i32, %arg1: i32, %arg2: memref<2xi32, #tpu.memory_space<smem>>) -> (i32, i32) {
    %c0_i32 = arith.constant 0 : i32
    %c0_i32_0 = arith.constant 0 : i32
    %c0_i32_1 = arith.constant 0 : i32
    return %c0_i32, %c0_i32_0 : i32, i32
  }
  func.func @transform_5(%arg0: i32, %arg1: i32, %arg2: memref<2xi32, #tpu.memory_space<smem>>) -> (i32, i32) {
    %c0_i32 = arith.constant 0 : i32
    %c0_i32_0 = arith.constant 0 : i32
    %c0_i32_1 = arith.constant 0 : i32
    return %c0_i32, %c0_i32_0 : i32, i32
  }
  func.func @transform_6(%arg0: i32, %arg1: i32, %arg2: memref<2xi32, #tpu.memory_space<smem>>) -> (i32, i32) {
    %c0_i32 = arith.constant 0 : i32
    %c0_i32_0 = arith.constant 0 : i32
    %c0_i32_1 = arith.constant 0 : i32
    return %c0_i32, %c0_i32_0 : i32, i32
  }
  func.func @transform_7(%arg0: i32, %arg1: i32, %arg2: memref<2xi32, #tpu.memory_space<smem>>) -> (i32, i32, i32) {
    %c0_i32 = arith.constant 0 : i32
    %c0_i32_0 = arith.constant 0 : i32
    return %arg0, %arg1, %c0_i32 : i32, i32, i32
  }
}

</mosaic_0001>

<llo_original>
// kernel: tpu_custom_call.1
$region0: #{tpu_custom_call.1}
  #allocation0 [shape = 'u32[]', space=smem, size = 0x4, offset = 0x4, fixed_abs, tag = 'smem constant byte address 0x4 - core index']
  #allocation1 [shape = 'u32[144,128]{1,0:T(1,128)}', space=vmem, size = 0x12000, scoped, tag = 'internal scratch']
  #allocation2 [shape = 's32[1]{0}', space=sflag, size = 0x4, scoped, tag = 'scoped memory for tpu_custom_call.1']
  #allocation3 [shape = 'u8[512]{0}', space=smem, size = 0x200, scoped, tag = 'prefetched SMEM operand 0']
  %s0 = inlined_call_operand.hbm [shape: s32[2], index: 0, kind: input, shape index: {}]
  %s1 = inlined_call_operand.hbm [shape: f32[2,8,16], index: 1, kind: input, shape index: {}]
  %s2 = inlined_call_operand.hbm [shape: f32[2,8,16], index: 2, kind: input, shape index: {}]
  %s3 = inlined_call_operand.hbm [shape: f32[2,8,16], index: 3, kind: input, shape index: {}]
  %s4 = inlined_call_operand.hbm [shape: f32[16,32], index: 4, kind: input, shape index: {}]
  %s5 = inlined_call_operand.hbm [shape: f32[16,32], index: 5, kind: input, shape index: {}]
  %s6 = inlined_call_operand.hbm [shape: f32[16,32], index: 6, kind: input, shape index: {}]
  %s7 = inlined_call_operand.hbm [shape: f32[32,32], index: 7, kind: input, shape index: {}]
  %s8 = inlined_call_operand.hbm [shape: f32[2,8,32], index: 8, kind: output, shape index: {}]
  %s9 = sld [smem:[#allocation0]]
  $region89: #{tpu_custom_call.1} parent=0
    _
  %s11 = ssub.s32 1, %s9
  %s12 = scalar_select 0, %s11, %s9
  %14 = dma.hbm_to_smem %s0, 16, [#allocation3], [#allocation2]
  %15 = dma.done [#allocation2], 16
  %16 = sfence
  $region1: #{tpu_custom_call.1} parent=0
    #allocation4 [shape = 'u8[8192]{0}', space=vmem, size = 0x2000, scoped, tag = 'input window, operand 1']
    #allocation5 [shape = 's32[2]{0}', space=sflag, size = 0x8, scoped, tag = 'scoped memory for tpu_custom_call.1']
    #allocation6 [shape = 's32[2]{0}', space=sflag, size = 0x8, scoped, tag = 'scoped memory for tpu_custom_call.1']
    #allocation7 [shape = 'u8[8192]{0}', space=vmem, size = 0x2000, scoped, tag = 'input window, operand 2']
    #allocation8 [shape = 's32[2]{0}', space=sflag, size = 0x8, scoped, tag = 'scoped memory for tpu_custom_call.1']
    #allocation9 [shape = 'u8[8192]{0}', space=vmem, size = 0x2000, scoped, tag = 'input window, operand 3']
    #allocation10 [shape = 'u8[8192]{0}', space=vmem, size = 0x2000, scoped, tag = 'input window, operand 4, single buffered']
    #allocation11 [shape = 's32[1]{0}', space=sflag, size = 0x4, scoped, tag = 'scoped memory for tpu_custom_call.1']
    #allocation12 [shape = 'u8[8192]{0}', space=vmem, size = 0x2000, scoped, tag = 'input window, operand 5, single buffered']
    #allocation13 [shape = 'u8[8192]{0}', space=vmem, size = 0x2000, scoped, tag = 'input window, operand 6, single buffered']
    #allocation14 [shape = 's32[1]{0}', space=sflag, size = 0x4, scoped, tag = 'scoped memory for tpu_custom_call.1']
    #allocation15 [shape = 'u8[16384]{0}', space=vmem, size = 0x4000, scoped, tag = 'input window, operand 7, single buffered']
    #allocation16 [shape = 'u8[8192]{0}', space=vmem, size = 0x2000, scoped, tag = 'output window, operand 0']
    %17 = vsyncpa [#allocation5], 0
    %s18 = scalar_lea.sflag [#allocation5], 1
    %19 = vsyncpa %s18, 0
    %20 = vsyncpa [#allocation8], 0
    %s21 = scalar_lea.sflag [#allocation8], 1
    %22 = vsyncpa %s21, 0
    %23 = vsyncpa [#allocation11], 0
    %24 = vsyncpa [#allocation14], 0
    %25 = vsyncpa [#allocation6], 0
    %s26 = scalar_lea.sflag [#allocation6], 1
    %27 = vsyncpa %s26, 0
    loop: start=0, step=1, limit=4
    $region2: #{tpu_custom_call.1} parent=1 // loop_pre_header
      _
    $region3: #{tpu_custom_call.1} parent=1 // loop_header
      %s29 = sphi 0, %s33
      %p30 = scmp.ge.s32.totalorder %s29, 4
      %s36 = sphi 0, %s48
      %s37 = sphi 0, %s44
      %s38 = sphi 0, %s36
      %s39 = sphi 0, %s37
      %s40 = sphi 0, %s38
      %s41 = sphi 0, %s39
      %s53 = sphi 0, %s55
      %s56 = sphi 0, %s53
      %s57 = sphi 0, %s56
      %s73 = sphi 0, %s57
      %s79 = sphi 0, %s81
      %s82 = sphi 0, %s79
      %s83 = sphi 0, %s82
      %s99 = sphi 0, %s83
      %s105 = sphi 0, %s107
      %s108 = sphi 0, %s105
      %s109 = sphi 0, %s108
      %s125 = sphi 0, %s109
      %s129 = sphi 0, %s129
      %s131 = sphi 0, %s129
      %s132 = sphi 0, %s131
      %s146 = sphi 0, %s132
      %s150 = sphi 0, %s150
      %s152 = sphi 0, %s150
      %s153 = sphi 0, %s152
      %s167 = sphi 0, %s153
      %s171 = sphi 0, %s171
      %s173 = sphi 0, %s171
      %s174 = sphi 0, %s173
      %s188 = sphi 0, %s174
      %s192 = sphi 0, %s192
      %s194 = sphi 0, %s192
      %s195 = sphi 0, %s194
      %s209 = sphi 0, %s195
      %s217 = sphi 0, %s219
      %s220 = sphi 0, %s217
      %s221 = sphi 0, %s220
      %s237 = sphi 0, %s221
    $region4: #{tpu_custom_call.1} parent=1 // loop_header_branch
      %32 = sbr.rel (%p30) target = $region8
    $region5: #{tpu_custom_call.1} parent=1 // loop_body
      %s34 = ssub.s32 %s29, 1
      %s35 = ssub.s32 %s29, 2
      %s42 = sadd.s32 1, %s37
      %p43 = scmp.ge.s32.totalorder %s42, 1
      %s44 = scalar_select %p43, 0, %s42
      %s45 = sadd.s32 1, %s36
      %s46 = scalar_select %p43, %s45, %s36
      %p47 = scmp.ge.s32.totalorder %s46, 2
      %s48 = scalar_select %p47, 0, %s46
      %s49 = ssub.s32 %s36, %s48
      %s50 = ssub.s32 %s37, %s44
      %s51 = sor.u32 %s49, %s50
      %p52 = scmp.eq.s32.totalorder %s51, 0
      %s54 = sadd.s32 %s53, 1
      %s55 = scalar_select %p52, %s53, %s54
      %p58 = pneg %p52
      %p59 = scmp.eq.s32.totalorder %s29, 1
      %p60 = por %p58, %p59
      %p61 = scmp.ne.s32.totalorder %s53, %s56
      %p62 = scmp.eq.s32.totalorder %s29, 0
      %p63 = por %p61, %p62
      %p64 = scmp.ne.s32.totalorder %s53, %s56
      %p65 = scmp.eq.s32.totalorder %s34, 1
      %p66 = por %p64, %p65
      %p67 = scmp.ne.s32.totalorder %s56, %s57
      %p68 = scmp.eq.s32.totalorder %s34, 0
      %p69 = por %p67, %p68
      %p70 = scmp.ne.s32.totalorder %s56, %s57
      %p71 = scmp.eq.s32.totalorder %s35, 1
      %p72 = por %p70, %p71
      %p74 = scmp.ne.s32.totalorder %s57, %s73
      %p75 = scmp.eq.s32.totalorder %s35, 0
      %p76 = por %p74, %p75
      %s77 = ssub.s32 %s36, %s48
      %p78 = scmp.eq.s32.totalorder %s77, 0
      %s80 = sadd.s32 %s79, 1
      %s81 = scalar_select %p78, %s79, %s80
      %p84 = pneg %p78
      %p85 = scmp.eq.s32.totalorder %s29, 1
      %p86 = por %p84, %p85
      %p87 = scmp.ne.s32.totalorder %s79, %s82
      %p88 = scmp.eq.s32.totalorder %s29, 0
      %p89 = por %p87, %p88
      %p90 = scmp.ne.s32.totalorder %s79, %s82
      %p91 = scmp.eq.s32.totalorder %s34, 1
      %p92 = por %p90, %p91
      %p93 = scmp.ne.s32.totalorder %s82, %s83
      %p94 = scmp.eq.s32.totalorder %s34, 0
      %p95 = por %p93, %p94
      %p96 = scmp.ne.s32.totalorder %s82, %s83
      %p97 = scmp.eq.s32.totalorder %s35, 1
      %p98 = por %p96, %p97
      %p100 = scmp.ne.s32.totalorder %s83, %s99
      %p101 = scmp.eq.s32.totalorder %s35, 0
      %p102 = por %p100, %p101
      %s103 = ssub.s32 %s36, %s48
      %p104 = scmp.eq.s32.totalorder %s103, 0
      %s106 = sadd.s32 %s105, 1
      %s107 = scalar_select %p104, %s105, %s106
      %p110 = pneg %p104
      %p111 = scmp.eq.s32.totalorder %s29, 1
      %p112 = por %p110, %p111
      %p113 = scmp.ne.s32.totalorder %s105, %s108
      %p114 = scmp.eq.s32.totalorder %s29, 0
      %p115 = por %p113, %p114
      %p116 = scmp.ne.s32.totalorder %s105, %s108
      %p117 = scmp.eq.s32.totalorder %s34, 1
      %p118 = por %p116, %p117
      %p119 = scmp.ne.s32.totalorder %s108, %s109
      %p120 = scmp.eq.s32.totalorder %s34, 0
      %p121 = por %p119, %p120
      %p122 = scmp.ne.s32.totalorder %s108, %s109
      %p123 = scmp.eq.s32.totalorder %s35, 1
      %p124 = por %p122, %p123
      %p126 = scmp.ne.s32.totalorder %s109, %s125
      %p127 = scmp.eq.s32.totalorder %s35, 0
      %p128 = por %p126, %p127
      %s130 = sadd.s32 %s129, 1
      %p133 = scmp.eq.s32.totalorder %s29, 1
      %p134 = scmp.ne.s32.totalorder %s129, %s131
      %p135 = scmp.eq.s32.totalorder %s29, 0
      %p136 = por %p134, %p135
      %p137 = scmp.ne.s32.totalorder %s129, %s131
      %p138 = scmp.eq.s32.totalorder %s34, 1
      %p139 = por %p137, %p138
      %p140 = scmp.ne.s32.totalorder %s131, %s132
      %p141 = scmp.eq.s32.totalorder %s34, 0
      %p142 = por %p140, %p141
      %p143 = scmp.ne.s32.totalorder %s131, %s132
      %p144 = scmp.eq.s32.totalorder %s35, 1
      %p145 = por %p143, %p144
      %p147 = scmp.ne.s32.totalorder %s132, %s146
      %p148 = scmp.eq.s32.totalorder %s35, 0
      %p149 = por %p147, %p148
      %s151 = sadd.s32 %s150, 1
      %p154 = scmp.eq.s32.totalorder %s29, 1
      %p155 = scmp.ne.s32.totalorder %s150, %s152
      %p156 = scmp.eq.s32.totalorder %s29, 0
      %p157 = por %p155, %p156
      %p158 = scmp.ne.s32.totalorder %s150, %s152
      %p159 = scmp.eq.s32.totalorder %s34, 1
      %p160 = por %p158, %p159
      %p161 = scmp.ne.s32.totalorder %s152, %s153
      %p162 = scmp.eq.s32.totalorder %s34, 0
      %p163 = por %p161, %p162
      %p164 = scmp.ne.s32.totalorder %s152, %s153
      %p165 = scmp.eq.s32.totalorder %s35, 1
      %p166 = por %p164, %p165
      %p168 = scmp.ne.s32.totalorder %s153, %s167
      %p169 = scmp.eq.s32.totalorder %s35, 0
      %p170 = por %p168, %p169
      %s172 = sadd.s32 %s171, 1
      %p175 = scmp.eq.s32.totalorder %s29, 1
      %p176 = scmp.ne.s32.totalorder %s171, %s173
      %p177 = scmp.eq.s32.totalorder %s29, 0
      %p178 = por %p176, %p177
      %p179 = scmp.ne.s32.totalorder %s171, %s173
      %p180 = scmp.eq.s32.totalorder %s34, 1
      %p181 = por %p179, %p180
      %p182 = scmp.ne.s32.totalorder %s173, %s174
      %p183 = scmp.eq.s32.totalorder %s34, 0
      %p184 = por %p182, %p183
      %p185 = scmp.ne.s32.totalorder %s173, %s174
      %p186 = scmp.eq.s32.totalorder %s35, 1
      %p187 = por %p185, %p186
      %p189 = scmp.ne.s32.totalorder %s174, %s188
      %p190 = scmp.eq.s32.totalorder %s35, 0
      %p191 = por %p189, %p190
      %s193 = sadd.s32 %s192, 1
      %p196 = scmp.eq.s32.totalorder %s29, 1
      %p197 = scmp.ne.s32.totalorder %s192, %s194
      %p198 = scmp.eq.s32.totalorder %s29, 0
      %p199 = por %p197, %p198
      %p200 = scmp.ne.s32.totalorder %s192, %s194
      %p201 = scmp.eq.s32.totalorder %s34, 1
      %p202 = por %p200, %p201
      %p203 = scmp.ne.s32.totalorder %s194, %s195
      %p204 = scmp.eq.s32.totalorder %s34, 0
      %p205 = por %p203, %p204
      %p206 = scmp.ne.s32.totalorder %s194, %s195
      %p207 = scmp.eq.s32.totalorder %s35, 1
      %p208 = por %p206, %p207
      %p210 = scmp.ne.s32.totalorder %s195, %s209
      %p211 = scmp.eq.s32.totalorder %s35, 0
      %p212 = por %p210, %p211
      %s213 = ssub.s32 %s36, %s48
      %s214 = ssub.s32 %s37, %s44
      %s215 = sor.u32 %s213, %s214
      %p216 = scmp.eq.s32.totalorder %s215, 0
      %s218 = sadd.s32 %s217, 1
      %s219 = scalar_select %p216, %s217, %s218
      %p222 = pneg %p216
      %p223 = scmp.eq.s32.totalorder %s29, 1
      %p224 = por %p222, %p223
      %p225 = scmp.ne.s32.totalorder %s217, %s220
      %p226 = scmp.eq.s32.totalorder %s29, 0
      %p227 = por %p225, %p226
      %p228 = scmp.ne.s32.totalorder %s217, %s220
      %p229 = scmp.eq.s32.totalorder %s34, 1
      %p230 = por %p228, %p229
      %p231 = scmp.ne.s32.totalorder %s220, %s221
      %p232 = scmp.eq.s32.totalorder %s34, 0
      %p233 = por %p231, %p232
      %p234 = scmp.ne.s32.totalorder %s220, %s221
      %p235 = scmp.eq.s32.totalorder %s35, 1
      %p236 = por %p234, %p235
      %p238 = scmp.ne.s32.totalorder %s221, %s237
      %p239 = scmp.eq.s32.totalorder %s35, 0
      %p240 = por %p238, %p239
      %p241 = scmp.le.s32.totalorder 1, %s29
      %p242 = scmp.lt.s32.totalorder %s29, 3
      %p243 = pnand %p241, %p242
      %p244 = pneg %p243
      // Predicated region
      $region9: #{tpu_custom_call.1} parent=5 // pred_check
        _
      $region10: #{tpu_custom_call.1} parent=5 // pred_check_branch
        %246 = sbr.rel (%p243) target = $region12
      $region11: #{tpu_custom_call.1} parent=5 // pred_region
        %s247 = ssub.s32 %s29, 1
        // Predicated region
        $region13: #{tpu_custom_call.1} parent=11 // pred_check
          %p248 = pneg %p142
        $region14: #{tpu_custom_call.1} parent=11 // pred_check_branch
          %250 = sbr.rel (%p248) target = $region16
        $region15: #{tpu_custom_call.1} parent=11 // pred_region
          %s252 = ssub.s32 256, 256
          %253 = vsyncadd [#allocation11], %s252
          %s254 = sshll.u32 [#allocation10], 4
          %s255 = int_to_ptr.vmem [resolvable:$true] %s254
          %260 = dma.hbm_to_vmem [thread:$0]  %s4, 256, %s255, [#allocation11], 128, 128, 8
        $region16: #{tpu_custom_call.1} parent=11 // pred_fallthru
          _
        // Predicated region
        $region17: #{tpu_custom_call.1} parent=11 // pred_check
          %p261 = pneg %p163
        $region18: #{tpu_custom_call.1} parent=11 // pred_check_branch
          %263 = sbr.rel (%p261) target = $region20
        $region19: #{tpu_custom_call.1} parent=11 // pred_region
          %s265 = ssub.s32 256, 256
          %266 = vsyncadd [#allocation11], %s265
          %s267 = sshll.u32 [#allocation12], 4
          %s268 = int_to_ptr.vmem [resolvable:$true] %s267
          %273 = dma.hbm_to_vmem [thread:$0]  %s5, 256, %s268, [#allocation11], 128, 128, 8
        $region20: #{tpu_custom_call.1} parent=11 // pred_fallthru
          _
        // Predicated region
        $region21: #{tpu_custom_call.1} parent=11 // pred_check
          %p274 = pneg %p184
        $region22: #{tpu_custom_call.1} parent=11 // pred_check_branch
          %276 = sbr.rel (%p274) target = $region24
        $region23: #{tpu_custom_call.1} parent=11 // pred_region
          %s278 = ssub.s32 256, 256
          %279 = vsyncadd [#allocation14], %s278
          %s280 = sshll.u32 [#allocation13], 4
          %s281 = int_to_ptr.vmem [resolvable:$true] %s280
          %286 = dma.hbm_to_vmem [thread:$0]  %s6, 256, %s281, [#allocation14], 128, 128, 8
        $region24: #{tpu_custom_call.1} parent=11 // pred_fallthru
          _
        // Predicated region
        $region25: #{tpu_custom_call.1} parent=11 // pred_check
          %p287 = pneg %p205
        $region26: #{tpu_custom_call.1} parent=11 // pred_check_branch
          %289 = sbr.rel (%p287) target = $region28
        $region27: #{tpu_custom_call.1} parent=11 // pred_region
          %s291 = ssub.s32 512, 512
          %292 = vsyncadd [#allocation14], %s291
          %s293 = sshll.u32 [#allocation15], 4
          %s294 = int_to_ptr.vmem [resolvable:$true] %s293
          %299 = dma.hbm_to_vmem [thread:$0]  %s7, 512, %s294, [#allocation14], 128, 128, 8
        $region28: #{tpu_custom_call.1} parent=11 // pred_fallthru
          _
      $region12: #{tpu_custom_call.1} parent=5 // pred_fallthru
        _
      %p300 = scmp.lt.s32.totalorder %s29, 2
      // Predicated region
      $region29: #{tpu_custom_call.1} parent=5 // pred_check
        %p301 = pneg %p300
      $region30: #{tpu_custom_call.1} parent=5 // pred_check_branch
        %303 = sbr.rel (%p301) target = $region32
      $region31: #{tpu_custom_call.1} parent=5 // pred_region
        // Predicated region
        $region33: #{tpu_custom_call.1} parent=31 // pred_check
          %p304 = pneg %p63
        $region34: #{tpu_custom_call.1} parent=31 // pred_check_branch
          %306 = sbr.rel (%p304) target = $region36
        $region35: #{tpu_custom_call.1} parent=31 // pred_region
          %s307 = sand.u32 %s53, 1
          %s308 = scalar_lea.sflag [#allocation5], %s307
          %s309 = sand.u32 %s53, 1
          %s310 = smul.addr %s309, 8
          %s311 = scalar_lea.vmem [#allocation4], %s310
          %s313 = ssub.s32 128, 128
          %314 = vsyncadd %s308, %s313
          %s315 = sadd.s32 %s37, %s36
          %s316 = smul.addr %s315, 128
          %s317 = scalar_lea.hbm %s1, %s316
          %s319 = sshll.u32 %s311, 4
          %s320 = int_to_ptr.vmem [resolvable:$true] %s319
          %322 = dma.hbm_to_vmem [thread:$0]  %s317, 128, %s320, %s308
        $region36: #{tpu_custom_call.1} parent=31 // pred_fallthru
          _
        // Predicated region
        $region37: #{tpu_custom_call.1} parent=31 // pred_check
          %p323 = pneg %p89
        $region38: #{tpu_custom_call.1} parent=31 // pred_check_branch
          %325 = sbr.rel (%p323) target = $region40
        $region39: #{tpu_custom_call.1} parent=31 // pred_region
          %s326 = sand.u32 %s29, 1
          %s327 = scalar_lea.sflag [#allocation8], %s326
          %s328 = sand.u32 %s79, 1
          %s329 = smul.addr %s328, 8
          %s330 = scalar_lea.vmem [#allocation7], %s329
          %s332 = ssub.s32 128, 128
          %333 = vsyncadd %s327, %s332
          %s334 = smul.addr %s36, 128
          %s335 = scalar_lea.hbm %s2, %s334
          %s337 = sshll.u32 %s330, 4
          %s338 = int_to_ptr.vmem [resolvable:$true] %s337
          %340 = dma.hbm_to_vmem [thread:$0]  %s335, 128, %s338, %s327
        $region40: #{tpu_custom_call.1} parent=31 // pred_fallthru
          _
        // Predicated region
        $region41: #{tpu_custom_call.1} parent=31 // pred_check
          %p341 = pneg %p115
        $region42: #{tpu_custom_call.1} parent=31 // pred_check_branch
          %343 = sbr.rel (%p341) target = $region44
        $region43: #{tpu_custom_call.1} parent=31 // pred_region
          %s344 = sand.u32 %s29, 1
          %s345 = scalar_lea.sflag [#allocation8], %s344
          %s346 = sand.u32 %s105, 1
          %s347 = smul.addr %s346, 8
          %s348 = scalar_lea.vmem [#allocation9], %s347
          %s350 = ssub.s32 128, 128
          %351 = vsyncadd %s345, %s350
          %s352 = smul.addr %s36, 128
          %s353 = scalar_lea.hbm %s3, %s352
          %s355 = sshll.u32 %s348, 4
          %s356 = int_to_ptr.vmem [resolvable:$true] %s355
          %358 = dma.hbm_to_vmem [thread:$0]  %s353, 128, %s356, %s345
        $region44: #{tpu_custom_call.1} parent=31 // pred_fallthru
          _
      $region32: #{tpu_custom_call.1} parent=5 // pred_fallthru
        _
      %p359 = scmp.le.s32.totalorder 1, %s29
      %p360 = scmp.lt.s32.totalorder %s29, 3
      %p361 = pnand %p359, %p360
      %p362 = pneg %p361
      // Predicated region
      $region45: #{tpu_custom_call.1} parent=5 // pred_check
        _
      $region46: #{tpu_custom_call.1} parent=5 // pred_check_branch
        %364 = sbr.rel (%p361) target = $region48
      $region47: #{tpu_custom_call.1} parent=5 // pred_region
        %s365 = ssub.s32 %s29, 1
        %s366 = sand.u32 %s56, 1
        %s367 = scalar_lea.sflag [#allocation5], %s366
        %s368 = sand.u32 %s56, 1
        %s369 = smul.addr %s368, 8
        %s370 = scalar_lea.vmem [#allocation4], %s369
        // Predicated region
        $region49: #{tpu_custom_call.1} parent=47 // pred_check
          %p371 = pneg %p69
        $region50: #{tpu_custom_call.1} parent=47 // pred_check_branch
          %373 = sbr.rel (%p371) target = $region52
        $region51: #{tpu_custom_call.1} parent=47 // pred_region
          %374 = dma.done %s367, 128
        $region52: #{tpu_custom_call.1} parent=47 // pred_fallthru
          _
        %s375 = sand.u32 %s34, 1
        %s376 = scalar_lea.sflag [#allocation8], %s375
        %s377 = sand.u32 %s82, 1
        %s378 = smul.addr %s377, 8
        %s379 = scalar_lea.vmem [#allocation7], %s378
        // Predicated region
        $region53: #{tpu_custom_call.1} parent=47 // pred_check
          %p380 = pneg %p95
        $region54: #{tpu_custom_call.1} parent=47 // pred_check_branch
          %382 = sbr.rel (%p380) target = $region56
        $region55: #{tpu_custom_call.1} parent=47 // pred_region
          %383 = dma.done %s376, 128
        $region56: #{tpu_custom_call.1} parent=47 // pred_fallthru
          _
        %s384 = sand.u32 %s34, 1
        %s385 = scalar_lea.sflag [#allocation8], %s384
        %s386 = sand.u32 %s108, 1
        %s387 = smul.addr %s386, 8
        %s388 = scalar_lea.vmem [#allocation9], %s387
        // Predicated region
        $region57: #{tpu_custom_call.1} parent=47 // pred_check
          %p389 = pneg %p121
        $region58: #{tpu_custom_call.1} parent=47 // pred_check_branch
          %391 = sbr.rel (%p389) target = $region60
        $region59: #{tpu_custom_call.1} parent=47 // pred_region
          %392 = dma.done %s385, 128
        $region60: #{tpu_custom_call.1} parent=47 // pred_fallthru
          _
        // Predicated region
        $region61: #{tpu_custom_call.1} parent=47 // pred_check
          %p393 = pneg %p142
        $region62: #{tpu_custom_call.1} parent=47 // pred_check_branch
          %395 = sbr.rel (%p393) target = $region64
        $region63: #{tpu_custom_call.1} parent=47 // pred_region
          %396 = dma.done [#allocation11], 256
        $region64: #{tpu_custom_call.1} parent=47 // pred_fallthru
          _
        // Predicated region
        $region65: #{tpu_custom_call.1} parent=47 // pred_check
          %p397 = pneg %p163
        $region66: #{tpu_custom_call.1} parent=47 // pred_check_branch
          %399 = sbr.rel (%p397) target = $region68
        $region67: #{tpu_custom_call.1} parent=47 // pred_region
          %400 = dma.done [#allocation11], 256
        $region68: #{tpu_custom_call.1} parent=47 // pred_fallthru
          _
        // Predicated region
        $region69: #{tpu_custom_call.1} parent=47 // pred_check
          %p401 = pneg %p184
        $region70: #{tpu_custom_call.1} parent=47 // pred_check_branch
          %403 = sbr.rel (%p401) target = $region72
        $region71: #{tpu_custom_call.1} parent=47 // pred_region
          %404 = dma.done [#allocation14], 256
        $region72: #{tpu_custom_call.1} parent=47 // pred_fallthru
          _
        // Predicated region
        $region73: #{tpu_custom_call.1} parent=47 // pred_check
          %p405 = pneg %p205
        $region74: #{tpu_custom_call.1} parent=47 // pred_check_branch
          %407 = sbr.rel (%p405) target = $region76
        $region75: #{tpu_custom_call.1} parent=47 // pred_region
          %408 = dma.done [#allocation14], 512
        $region76: #{tpu_custom_call.1} parent=47 // pred_fallthru
          _
        %s409 = sand.u32 %s56, 1
        %s410 = scalar_lea.sflag [#allocation5], %s409
        %s411 = sand.u32 %s56, 1
        %s412 = smul.addr %s411, 8
        %s413 = scalar_lea.vmem [#allocation4], %s412
        %p414 = pneg %p69
        %p415 = pneg %p66
        %s416 = sand.u32 %s34, 1
        %s417 = scalar_lea.sflag [#allocation8], %s416
        %s418 = sand.u32 %s82, 1
        %s419 = smul.addr %s418, 8
        %s420 = scalar_lea.vmem [#allocation7], %s419
        %p421 = pneg %p95
        %p422 = pneg %p92
        %s423 = sand.u32 %s34, 1
        %s424 = scalar_lea.sflag [#allocation8], %s423
        %s425 = sand.u32 %s108, 1
        %s426 = smul.addr %s425, 8
        %s427 = scalar_lea.vmem [#allocation9], %s426
        %p428 = pneg %p121
        %p429 = pneg %p118
        %p430 = pneg %p142
        %p431 = pneg %p139
        %p432 = pneg %p163
        %p433 = pneg %p160
        %p434 = pneg %p184
        %p435 = pneg %p181
        %p436 = pneg %p205
        %p437 = pneg %p202
        %p438 = pneg %p233
        %p439 = pneg %p230
        %s440 = sand.u32 %s220, 1
        %s441 = scalar_lea.sflag [#allocation6], %s440
        %s442 = sand.u32 %s220, 1
        %s443 = smul.addr %s442, 8
        %s444 = scalar_lea.vmem [#allocation16], %s443
        %v445 = vld [vmem:[%s370] sm:$0xff]
        %v446 = vld [vmem:[#allocation10] sm:$0xff]
        %v447 = vld [vmem:[#allocation10 + $0x8] sm:$0xff]
        %vm448 = vcmask 130048
        %v450 = vsel %vm448, %v445, 0
        %452 = vmatprep.subr.mxu0 0.0
        %453 = vmatpush1.msra.mxu0 0.0
        %454 = vmatprep.subr.mxu0 0.0
        %455 = vmatpush1.msra.mxu0 0.0
        %456 = vmatprep.subr.mxu0 0.0
        %457 = vmatpush1.msra.mxu0 0.0
        %458 = vmatprep.subr.mxu0 0.0
        %459 = vmatpush1.msra.mxu0 0.0
        %460 = vmatprep.subr.mxu0 0.0
        %461 = vmatpush1.msra.mxu0 0.0
        %462 = vmatprep.subr.mxu0 0.0
        %463 = vmatpush1.msra.mxu0 0.0
        %464 = vmatprep.subr.mxu0 0.0
        %465 = vmatpush1.msra.mxu0 0.0
        %466 = vmatprep.subr.mxu0 0.0
        %467 = vmatpush1.msra.mxu0 0.0
        %468 = vmatprep.subr.mxu0 0.0
        %469 = vmatpush1.msra.mxu0 0.0
        %470 = vmatprep.subr.mxu0 0.0
        %471 = vmatpush1.msra.mxu0 0.0
        %472 = vmatprep.subr.mxu0 0.0
        %473 = vmatpush1.msra.mxu0 0.0
        %474 = vmatprep.subr.mxu0 0.0
        %475 = vmatpush1.msra.mxu0 0.0
        %476 = vmatprep.subr.mxu0 0.0
        %477 = vmatpush1.msra.mxu0 0.0
        %478 = vmatprep.subr.mxu0 0.0
        %479 = vmatpush1.msra.mxu0 0.0
        %480 = vmatprep.subr.mxu0 0.0
        %481 = vmatpush1.msra.mxu0 %v447
        %482 = vmatprep.subr.mxu0 0.0
        %483 = vmatpush1.msra.mxu0 %v446
        %484 = vmatprep.subr.mxu0 0.0
        %485 = vmatpush2.msra.mxu0 0.0
        %486 = vmatprep.subr.mxu0 0.0
        %487 = vmatpush2.msra.mxu0 0.0
        %488 = vmatprep.subr.mxu0 0.0
        %489 = vmatpush2.msra.mxu0 0.0
        %490 = vmatprep.subr.mxu0 0.0
        %491 = vmatpush2.msra.mxu0 0.0
        %492 = vmatprep.subr.mxu0 0.0
        %493 = vmatpush2.msra.mxu0 0.0
        %494 = vmatprep.subr.mxu0 0.0
        %495 = vmatpush2.msra.mxu0 0.0
        %496 = vmatprep.subr.mxu0 0.0
        %497 = vmatpush2.msra.mxu0 0.0
        %498 = vmatprep.subr.mxu0 0.0
        %499 = vmatpush2.msra.mxu0 0.0
        %500 = vmatprep.subr.mxu0 0.0
        %501 = vmatpush2.msra.mxu0 0.0
        %502 = vmatprep.subr.mxu0 0.0
        %503 = vmatpush2.msra.mxu0 0.0
        %504 = vmatprep.subr.mxu0 0.0
        %505 = vmatpush2.msra.mxu0 0.0
        %506 = vmatprep.subr.mxu0 0.0
        %507 = vmatpush2.msra.mxu0 0.0
        %508 = vmatprep.subr.mxu0 0.0
        %509 = vmatpush2.msra.mxu0 0.0
        %510 = vmatprep.subr.mxu0 0.0
        %511 = vmatpush2.msra.mxu0 0.0
        %512 = vmatprep.subr.mxu0 0.0
        %513 = vmatpush2.msra.mxu0 0.0
        %514 = vmatprep.subr.mxu0 0.0
        %515 = vmatpush2.msra.mxu0 0.0
        %516 = vmatprep.mubr.f32.mxu0 0.0
        %517 = vmatmul.mubr.f32.gmra.mxu0 %v450
        %v518 = vpop.f32.mrf.mxu0
        %v519 = vadd.f32 0.0, %v518
        %v520 = vpop.f32.mrf.mxu0
        %521 = vdwg.mxu0
        %v522 = vmul.f32 %v519, 0.35355338
        %v523 = vld [vmem:[%s379] sm:$0xff]
        %v524 = vld [vmem:[#allocation12] sm:$0xff]
        %v525 = vld [vmem:[#allocation12 + $0x8] sm:$0xff]
        %v527 = vsel %vm448, %v523, 0
        %529 = vmatprep.subr.mxu0 0.0
        %530 = vmatpush1.msra.mxu0 0.0
        %531 = vmatprep.subr.mxu0 0.0
        %532 = vmatpush1.msra.mxu0 0.0
        %533 = vmatprep.subr.mxu0 0.0
        %534 = vmatpush1.msra.mxu0 0.0
        %535 = vmatprep.subr.mxu0 0.0
        %536 = vmatpush1.msra.mxu0 0.0
        %537 = vmatprep.subr.mxu0 0.0
        %538 = vmatpush1.msra.mxu0 0.0
        %539 = vmatprep.subr.mxu0 0.0
        %540 = vmatpush1.msra.mxu0 0.0
        %541 = vmatprep.subr.mxu0 0.0
        %542 = vmatpush1.msra.mxu0 0.0
        %543 = vmatprep.subr.mxu0 0.0
        %544 = vmatpush1.msra.mxu0 0.0
        %545 = vmatprep.subr.mxu0 0.0
        %546 = vmatpush1.msra.mxu0 0.0
        %547 = vmatprep.subr.mxu0 0.0
        %548 = vmatpush1.msra.mxu0 0.0
        %549 = vmatprep.subr.mxu0 0.0
        %550 = vmatpush1.msra.mxu0 0.0
        %551 = vmatprep.subr.mxu0 0.0
        %552 = vmatpush1.msra.mxu0 0.0
        %553 = vmatprep.subr.mxu0 0.0
        %554 = vmatpush1.msra.mxu0 0.0
        %555 = vmatprep.subr.mxu0 0.0
        %556 = vmatpush1.msra.mxu0 0.0
        %557 = vmatprep.subr.mxu0 0.0
        %558 = vmatpush1.msra.mxu0 %v525
        %559 = vmatprep.subr.mxu0 0.0
        %560 = vmatpush1.msra.mxu0 %v524
        %561 = vmatprep.subr.mxu0 0.0
        %562 = vmatpush2.msra.mxu0 0.0
        %563 = vmatprep.subr.mxu0 0.0
        %564 = vmatpush2.msra.mxu0 0.0
        %565 = vmatprep.subr.mxu0 0.0
        %566 = vmatpush2.msra.mxu0 0.0
        %567 = vmatprep.subr.mxu0 0.0
        %568 = vmatpush2.msra.mxu0 0.0
        %569 = vmatprep.subr.mxu0 0.0
        %570 = vmatpush2.msra.mxu0 0.0
        %571 = vmatprep.subr.mxu0 0.0
        %572 = vmatpush2.msra.mxu0 0.0
        %573 = vmatprep.subr.mxu0 0.0
        %574 = vmatpush2.msra.mxu0 0.0
        %575 = vmatprep.subr.mxu0 0.0
        %576 = vmatpush2.msra.mxu0 0.0
        %577 = vmatprep.subr.mxu0 0.0
        %578 = vmatpush2.msra.mxu0 0.0
        %579 = vmatprep.subr.mxu0 0.0
        %580 = vmatpush2.msra.mxu0 0.0
        %581 = vmatprep.subr.mxu0 0.0
        %582 = vmatpush2.msra.mxu0 0.0
        %583 = vmatprep.subr.mxu0 0.0
        %584 = vmatpush2.msra.mxu0 0.0
        %585 = vmatprep.subr.mxu0 0.0
        %586 = vmatpush2.msra.mxu0 0.0
        %587 = vmatprep.subr.mxu0 0.0
        %588 = vmatpush2.msra.mxu0 0.0
        %589 = vmatprep.subr.mxu0 0.0
        %590 = vmatpush2.msra.mxu0 0.0
        %591 = vmatprep.subr.mxu0 0.0
        %592 = vmatpush2.msra.mxu0 0.0
        %593 = vmatprep.mubr.f32.mxu0 0.0
        %594 = vmatmul.mubr.f32.gmra.mxu0 %v527
        %v595 = vpop.f32.mrf.mxu0
        %v596 = vadd.f32 0.0, %v595
        %v597 = vpop.f32.mrf.mxu0
        %598 = vdwg.mxu0
        %v599 = vld [vmem:[%s388] sm:$0xff]
        %v600 = vld [vmem:[#allocation13] sm:$0xff]
        %v601 = vld [vmem:[#allocation13 + $0x8] sm:$0xff]
        %v603 = vsel %vm448, %v599, 0
        %605 = vmatprep.subr.mxu0 0.0
        %606 = vmatpush1.msra.mxu0 0.0
        %607 = vmatprep.subr.mxu0 0.0
        %608 = vmatpush1.msra.mxu0 0.0
        %609 = vmatprep.subr.mxu0 0.0
        %610 = vmatpush1.msra.mxu0 0.0
        %611 = vmatprep.subr.mxu0 0.0
        %612 = vmatpush1.msra.mxu0 0.0
        %613 = vmatprep.subr.mxu0 0.0
        %614 = vmatpush1.msra.mxu0 0.0
        %615 = vmatprep.subr.mxu0 0.0
        %616 = vmatpush1.msra.mxu0 0.0
        %617 = vmatprep.subr.mxu0 0.0
        %618 = vmatpush1.msra.mxu0 0.0
        %619 = vmatprep.subr.mxu0 0.0
        %620 = vmatpush1.msra.mxu0 0.0
        %621 = vmatprep.subr.mxu0 0.0
        %622 = vmatpush1.msra.mxu0 0.0
        %623 = vmatprep.subr.mxu0 0.0
        %624 = vmatpush1.msra.mxu0 0.0
        %625 = vmatprep.subr.mxu0 0.0
        %626 = vmatpush1.msra.mxu0 0.0
        %627 = vmatprep.subr.mxu0 0.0
        %628 = vmatpush1.msra.mxu0 0.0
        %629 = vmatprep.subr.mxu0 0.0
        %630 = vmatpush1.msra.mxu0 0.0
        %631 = vmatprep.subr.mxu0 0.0
        %632 = vmatpush1.msra.mxu0 0.0
        %633 = vmatprep.subr.mxu0 0.0
        %634 = vmatpush1.msra.mxu0 %v601
        %635 = vmatprep.subr.mxu0 0.0
        %636 = vmatpush1.msra.mxu0 %v600
        %637 = vmatprep.subr.mxu0 0.0
        %638 = vmatpush2.msra.mxu0 0.0
        %639 = vmatprep.subr.mxu0 0.0
        %640 = vmatpush2.msra.mxu0 0.0
        %641 = vmatprep.subr.mxu0 0.0
        %642 = vmatpush2.msra.mxu0 0.0
        %643 = vmatprep.subr.mxu0 0.0
        %644 = vmatpush2.msra.mxu0 0.0
        %645 = vmatprep.subr.mxu0 0.0
        %646 = vmatpush2.msra.mxu0 0.0
        %647 = vmatprep.subr.mxu0 0.0
        %648 = vmatpush2.msra.mxu0 0.0
        %649 = vmatprep.subr.mxu0 0.0
        %650 = vmatpush2.msra.mxu0 0.0
        %651 = vmatprep.subr.mxu0 0.0
        %652 = vmatpush2.msra.mxu0 0.0
        %653 = vmatprep.subr.mxu0 0.0
        %654 = vmatpush2.msra.mxu0 0.0
        %655 = vmatprep.subr.mxu0 0.0
        %656 = vmatpush2.msra.mxu0 0.0
        %657 = vmatprep.subr.mxu0 0.0
        %658 = vmatpush2.msra.mxu0 0.0
        %659 = vmatprep.subr.mxu0 0.0
        %660 = vmatpush2.msra.mxu0 0.0
        %661 = vmatprep.subr.mxu0 0.0
        %662 = vmatpush2.msra.mxu0 0.0
        %663 = vmatprep.subr.mxu0 0.0
        %664 = vmatpush2.msra.mxu0 0.0
        %665 = vmatprep.subr.mxu0 0.0
        %666 = vmatpush2.msra.mxu0 0.0
        %667 = vmatprep.subr.mxu0 0.0
        %668 = vmatpush2.msra.mxu0 0.0
        %669 = vmatprep.mubr.f32.mxu0 0.0
        %670 = vmatmul.mubr.f32.gmra.mxu0 %v603
        %v671 = vpop.f32.mrf.mxu0
        %v672 = vadd.f32 0.0, %v671
        %v673 = vpop.f32.mrf.mxu0
        %674 = vdwg.mxu0
        %s675 = sld [smem:[#allocation3 + %s38]]
        %v676 = vlaneseq
        %v677 = vand.u32 %v676, 127
        %v678 = vstv %s675
        %vm679 = vcmp.lt.s32.totalorder %v677, %v678
        %vm680 = vcmask 64512
        %v682 = vsel %vm680, %v522, 0
        %v685 = vsel %vm680, %v596, 0
        %687 = vmatprep.subr.mxu0 0.0
        %688 = vmatpush1.xpose.msra.mxu0 0.0
        %689 = vmatprep.subr.mxu0 0.0
        %690 = vmatpush1.xpose.msra.mxu0 0.0
        %691 = vmatprep.subr.mxu0 0.0
        %692 = vmatpush1.xpose.msra.mxu0 0.0
        %693 = vmatprep.subr.mxu0 0.0
        %694 = vmatpush1.xpose.msra.mxu0 0.0
        %695 = vmatprep.subr.mxu0 0.0
        %696 = vmatpush1.xpose.msra.mxu0 0.0
        %697 = vmatprep.subr.mxu0 0.0
        %698 = vmatpush1.xpose.msra.mxu0 0.0
        %699 = vmatprep.subr.mxu0 0.0
        %700 = vmatpush1.xpose.msra.mxu0 0.0
        %701 = vmatprep.subr.mxu0 0.0
        %702 = vmatpush1.xpose.msra.mxu0 0.0
        %703 = vmatprep.subr.mxu0 0.0
        %704 = vmatpush1.xpose.msra.mxu0 0.0
        %705 = vmatprep.subr.mxu0 0.0
        %706 = vmatpush1.xpose.msra.mxu0 0.0
        %707 = vmatprep.subr.mxu0 0.0
        %708 = vmatpush1.xpose.msra.mxu0 0.0
        %709 = vmatprep.subr.mxu0 0.0
        %710 = vmatpush1.xpose.msra.mxu0 0.0
        %711 = vmatprep.subr.mxu0 0.0
        %712 = vmatpush1.xpose.msra.mxu0 0.0
        %713 = vmatprep.subr.mxu0 0.0
        %714 = vmatpush1.xpose.msra.mxu0 0.0
        %715 = vmatprep.subr.mxu0 0.0
        %716 = vmatpush1.xpose.msra.mxu0 0.0
        %717 = vmatprep.subr.mxu0 0.0
        %718 = vmatpush1.xpose.msra.mxu0 %v685
        %719 = vmatprep.subr.mxu0 0.0
        %720 = vmatpush2.xpose.msra.mxu0 0.0
        %721 = vmatprep.subr.mxu0 0.0
        %722 = vmatpush2.xpose.msra.mxu0 0.0
        %723 = vmatprep.subr.mxu0 0.0
        %724 = vmatpush2.xpose.msra.mxu0 0.0
        %725 = vmatprep.subr.mxu0 0.0
        %726 = vmatpush2.xpose.msra.mxu0 0.0
        %727 = vmatprep.subr.mxu0 0.0
        %728 = vmatpush2.xpose.msra.mxu0 0.0
        %729 = vmatprep.subr.mxu0 0.0
        %730 = vmatpush2.xpose.msra.mxu0 0.0
        %731 = vmatprep.subr.mxu0 0.0
        %732 = vmatpush2.xpose.msra.mxu0 0.0
        %733 = vmatprep.subr.mxu0 0.0
        %734 = vmatpush2.xpose.msra.mxu0 0.0
        %735 = vmatprep.subr.mxu0 0.0
        %736 = vmatpush2.xpose.msra.mxu0 0.0
        %737 = vmatprep.subr.mxu0 0.0
        %738 = vmatpush2.xpose.msra.mxu0 0.0
        %739 = vmatprep.subr.mxu0 0.0
        %740 = vmatpush2.xpose.msra.mxu0 0.0
        %741 = vmatprep.subr.mxu0 0.0
        %742 = vmatpush2.xpose.msra.mxu0 0.0
        %743 = vmatprep.subr.mxu0 0.0
        %744 = vmatpush2.xpose.msra.mxu0 0.0
        %745 = vmatprep.subr.mxu0 0.0
        %746 = vmatpush2.xpose.msra.mxu0 0.0
        %747 = vmatprep.subr.mxu0 0.0
        %748 = vmatpush2.xpose.msra.mxu0 0.0
        %749 = vmatprep.subr.mxu0 0.0
        %750 = vmatpush2.xpose.msra.mxu0 0.0
        %751 = vmatprep.mubr.f32.mxu0 0.0
        %752 = vmatmul.mubr.f32.gmra.mxu0 %v682
        %v753 = vpop.f32.mrf.mxu0
        %v754 = vadd.f32 0.0, %v753
        %v755 = vpop.f32.mrf.mxu0
        %756 = vdwg.mxu0
        %v757 = vsel %vm679, %v754, -1000000.0
        %v758 = vsel %vm680, %v757, -inf
        %759 = vmax.xlane.f32.xlu0 %v758
        %v760 = vpop.xlane.xlu0 %759
        %v761 = vsub.f32 %v757, %v760
        %v762 = vmul.f32 %v761, 1.442695
        %v763 = vpow.pop %v762
        %v764 = vsel %vm680, %v763, 0.0
        %765 = vadd.xlane.f32.xlu0 %v764
        %v766 = vpop.xlane.xlu0 %765
        %v767 = vrcp.pop %v766
        %v768 = vmul.f32 %v763, %v767
        %v770 = vsel %vm680, %v768, 0
        %772 = vmatprep.subr.mxu0 0.0
        %773 = vmatpush1.msra.mxu0 0.0
        %774 = vmatprep.subr.mxu0 0.0
        %775 = vmatpush1.msra.mxu0 0.0
        %776 = vmatprep.subr.mxu0 0.0
        %777 = vmatpush1.msra.mxu0 0.0
        %778 = vmatprep.subr.mxu0 0.0
        %779 = vmatpush1.msra.mxu0 0.0
        %780 = vmatprep.subr.mxu0 0.0
        %781 = vmatpush1.msra.mxu0 0.0
        %782 = vmatprep.subr.mxu0 0.0
        %783 = vmatpush1.msra.mxu0 0.0
        %784 = vmatprep.subr.mxu0 0.0
        %785 = vmatpush1.msra.mxu0 0.0
        %786 = vmatprep.subr.mxu0 0.0
        %787 = vmatpush1.msra.mxu0 0.0
        %788 = vmatprep.subr.mxu0 0.0
        %789 = vmatpush1.msra.mxu0 0.0
        %790 = vmatprep.subr.mxu0 0.0
        %791 = vmatpush1.msra.mxu0 0.0
        %792 = vmatprep.subr.mxu0 0.0
        %793 = vmatpush1.msra.mxu0 0.0
        %794 = vmatprep.subr.mxu0 0.0
        %795 = vmatpush1.msra.mxu0 0.0
        %796 = vmatprep.subr.mxu0 0.0
        %797 = vmatpush1.msra.mxu0 0.0
        %798 = vmatprep.subr.mxu0 0.0
        %799 = vmatpush1.msra.mxu0 0.0
        %800 = vmatprep.subr.mxu0 0.0
        %801 = vmatpush1.msra.mxu0 0.0
        %802 = vmatprep.subr.mxu0 0.0
        %803 = vmatpush1.msra.mxu0 %v672
        %804 = vmatprep.subr.mxu0 0.0
        %805 = vmatpush2.msra.mxu0 0.0
        %806 = vmatprep.subr.mxu0 0.0
        %807 = vmatpush2.msra.mxu0 0.0
        %808 = vmatprep.subr.mxu0 0.0
        %809 = vmatpush2.msra.mxu0 0.0
        %810 = vmatprep.subr.mxu0 0.0
        %811 = vmatpush2.msra.mxu0 0.0
        %812 = vmatprep.subr.mxu0 0.0
        %813 = vmatpush2.msra.mxu0 0.0
        %814 = vmatprep.subr.mxu0 0.0
        %815 = vmatpush2.msra.mxu0 0.0
        %816 = vmatprep.subr.mxu0 0.0
        %817 = vmatpush2.msra.mxu0 0.0
        %818 = vmatprep.subr.mxu0 0.0
        %819 = vmatpush2.msra.mxu0 0.0
        %820 = vmatprep.subr.mxu0 0.0
        %821 = vmatpush2.msra.mxu0 0.0
        %822 = vmatprep.subr.mxu0 0.0
        %823 = vmatpush2.msra.mxu0 0.0
        %824 = vmatprep.subr.mxu0 0.0
        %825 = vmatpush2.msra.mxu0 0.0
        %826 = vmatprep.subr.mxu0 0.0
        %827 = vmatpush2.msra.mxu0 0.0
        %828 = vmatprep.subr.mxu0 0.0
        %829 = vmatpush2.msra.mxu0 0.0
        %830 = vmatprep.subr.mxu0 0.0
        %831 = vmatpush2.msra.mxu0 0.0
        %832 = vmatprep.subr.mxu0 0.0
        %833 = vmatpush2.msra.mxu0 0.0
        %834 = vmatprep.subr.mxu0 0.0
        %835 = vmatpush2.msra.mxu0 0.0
        %836 = vmatprep.mubr.f32.mxu0 0.0
        %837 = vmatmul.mubr.f32.gmra.mxu0 %v770
        %v838 = vpop.f32.mrf.mxu0
        %v839 = vadd.f32 0.0, %v838
        %v840 = vpop.f32.mrf.mxu0
        %841 = vdwg.mxu0
        %v842 = vld [vmem:[#allocation15] sm:$0xff]
        %843 = vrot.lane.b32.xlu0 %v522, 120
        %v844 = vpop.permute.xlu0 %843
        %845 = vrot.lane.b32.xlu0 %v596, 120
        %v846 = vpop.permute.xlu0 %845
        %v847 = vsel %vm680, %v844, 0
        %v849 = vsel %vm680, %v846, 0
        %851 = vmatprep.subr.mxu0 0.0
        %852 = vmatpush1.xpose.msra.mxu0 0.0
        %853 = vmatprep.subr.mxu0 0.0
        %854 = vmatpush1.xpose.msra.mxu0 0.0
        %855 = vmatprep.subr.mxu0 0.0
        %856 = vmatpush1.xpose.msra.mxu0 0.0
        %857 = vmatprep.subr.mxu0 0.0
        %858 = vmatpush1.xpose.msra.mxu0 0.0
        %859 = vmatprep.subr.mxu0 0.0
        %860 = vmatpush1.xpose.msra.mxu0 0.0
        %861 = vmatprep.subr.mxu0 0.0
        %862 = vmatpush1.xpose.msra.mxu0 0.0
        %863 = vmatprep.subr.mxu0 0.0
        %864 = vmatpush1.xpose.msra.mxu0 0.0
        %865 = vmatprep.subr.mxu0 0.0
        %866 = vmatpush1.xpose.msra.mxu0 0.0
        %867 = vmatprep.subr.mxu0 0.0
        %868 = vmatpush1.xpose.msra.mxu0 0.0
        %869 = vmatprep.subr.mxu0 0.0
        %870 = vmatpush1.xpose.msra.mxu0 0.0
        %871 = vmatprep.subr.mxu0 0.0
        %872 = vmatpush1.xpose.msra.mxu0 0.0
        %873 = vmatprep.subr.mxu0 0.0
        %874 = vmatpush1.xpose.msra.mxu0 0.0
        %875 = vmatprep.subr.mxu0 0.0
        %876 = vmatpush1.xpose.msra.mxu0 0.0
        %877 = vmatprep.subr.mxu0 0.0
        %878 = vmatpush1.xpose.msra.mxu0 0.0
        %879 = vmatprep.subr.mxu0 0.0
        %880 = vmatpush1.xpose.msra.mxu0 0.0
        %881 = vmatprep.subr.mxu0 0.0
        %882 = vmatpush1.xpose.msra.mxu0 %v849
        %883 = vmatprep.subr.mxu0 0.0
        %884 = vmatpush2.xpose.msra.mxu0 0.0
        %885 = vmatprep.subr.mxu0 0.0
        %886 = vmatpush2.xpose.msra.mxu0 0.0
        %887 = vmatprep.subr.mxu0 0.0
        %888 = vmatpush2.xpose.msra.mxu0 0.0
        %889 = vmatprep.subr.mxu0 0.0
        %890 = vmatpush2.xpose.msra.mxu0 0.0
        %891 = vmatprep.subr.mxu0 0.0
        %892 = vmatpush2.xpose.msra.mxu0 0.0
        %893 = vmatprep.subr.mxu0 0.0
        %894 = vmatpush2.xpose.msra.mxu0 0.0
        %895 = vmatprep.subr.mxu0 0.0
        %896 = vmatpush2.xpose.msra.mxu0 0.0
        %897 = vmatprep.subr.mxu0 0.0
        %898 = vmatpush2.xpose.msra.mxu0 0.0
        %899 = vmatprep.subr.mxu0 0.0
        %900 = vmatpush2.xpose.msra.mxu0 0.0
        %901 = vmatprep.subr.mxu0 0.0
        %902 = vmatpush2.xpose.msra.mxu0 0.0
        %903 = vmatprep.subr.mxu0 0.0
        %904 = vmatpush2.xpose.msra.mxu0 0.0
        %905 = vmatprep.subr.mxu0 0.0
        %906 = vmatpush2.xpose.msra.mxu0 0.0
        %907 = vmatprep.subr.mxu0 0.0
        %908 = vmatpush2.xpose.msra.mxu0 0.0
        %909 = vmatprep.subr.mxu0 0.0
        %910 = vmatpush2.xpose.msra.mxu0 0.0
        %911 = vmatprep.subr.mxu0 0.0
        %912 = vmatpush2.xpose.msra.mxu0 0.0
        %913 = vmatprep.subr.mxu0 0.0
        %914 = vmatpush2.xpose.msra.mxu0 0.0
        %915 = vmatprep.mubr.f32.mxu0 0.0
        %916 = vmatmul.mubr.f32.gmra.mxu0 %v847
        %v917 = vpop.f32.mrf.mxu0
        %v918 = vadd.f32 0.0, %v917
        %v919 = vpop.f32.mrf.mxu0
        %920 = vdwg.mxu0
        %v921 = vsel %vm679, %v918, -1000000.0
        %v922 = vsel %vm680, %v921, -inf
        %923 = vmax.xlane.f32.xlu0 %v922
        %v924 = vpop.xlane.xlu0 %923
        %v925 = vsub.f32 %v921, %v924
        %v926 = vmul.f32 %v925, 1.442695
        %v927 = vpow.pop %v926
        %v928 = vsel %vm680, %v927, 0.0
        %929 = vadd.xlane.f32.xlu0 %v928
        %v930 = vpop.xlane.xlu0 %929
        %v931 = vrcp.pop %v930
        %v932 = vmul.f32 %v927, %v931
        %934 = vrot.lane.b32.xlu0 %v672, 120
        %v935 = vpop.permute.xlu0 %934
        %v938 = vsel %vm680, %v932, 0
        %940 = vmatprep.subr.mxu0 0.0
        %941 = vmatpush1.msra.mxu0 0.0
        %942 = vmatprep.subr.mxu0 0.0
        %943 = vmatpush1.msra.mxu0 0.0
        %944 = vmatprep.subr.mxu0 0.0
        %945 = vmatpush1.msra.mxu0 0.0
        %946 = vmatprep.subr.mxu0 0.0
        %947 = vmatpush1.msra.mxu0 0.0
        %948 = vmatprep.subr.mxu0 0.0
        %949 = vmatpush1.msra.mxu0 0.0
        %950 = vmatprep.subr.mxu0 0.0
        %951 = vmatpush1.msra.mxu0 0.0
        %952 = vmatprep.subr.mxu0 0.0
        %953 = vmatpush1.msra.mxu0 0.0
        %954 = vmatprep.subr.mxu0 0.0
        %955 = vmatpush1.msra.mxu0 0.0
        %956 = vmatprep.subr.mxu0 0.0
        %957 = vmatpush1.msra.mxu0 0.0
        %958 = vmatprep.subr.mxu0 0.0
        %959 = vmatpush1.msra.mxu0 0.0
        %960 = vmatprep.subr.mxu0 0.0
        %961 = vmatpush1.msra.mxu0 0.0
        %962 = vmatprep.subr.mxu0 0.0
        %963 = vmatpush1.msra.mxu0 0.0
        %964 = vmatprep.subr.mxu0 0.0
        %965 = vmatpush1.msra.mxu0 0.0
        %966 = vmatprep.subr.mxu0 0.0
        %967 = vmatpush1.msra.mxu0 0.0
        %968 = vmatprep.subr.mxu0 0.0
        %969 = vmatpush1.msra.mxu0 0.0
        %970 = vmatprep.subr.mxu0 0.0
        %971 = vmatpush1.msra.mxu0 %v935
        %972 = vmatprep.subr.mxu0 0.0
        %973 = vmatpush2.msra.mxu0 0.0
        %974 = vmatprep.subr.mxu0 0.0
        %975 = vmatpush2.msra.mxu0 0.0
        %976 = vmatprep.subr.mxu0 0.0
        %977 = vmatpush2.msra.mxu0 0.0
        %978 = vmatprep.subr.mxu0 0.0
        %979 = vmatpush2.msra.mxu0 0.0
        %980 = vmatprep.subr.mxu0 0.0
        %981 = vmatpush2.msra.mxu0 0.0
        %982 = vmatprep.subr.mxu0 0.0
        %983 = vmatpush2.msra.mxu0 0.0
        %984 = vmatprep.subr.mxu0 0.0
        %985 = vmatpush2.msra.mxu0 0.0
        %986 = vmatprep.subr.mxu0 0.0
        %987 = vmatpush2.msra.mxu0 0.0
        %988 = vmatprep.subr.mxu0 0.0
        %989 = vmatpush2.msra.mxu0 0.0
        %990 = vmatprep.subr.mxu0 0.0
        %991 = vmatpush2.msra.mxu0 0.0
        %992 = vmatprep.subr.mxu0 0.0
        %993 = vmatpush2.msra.mxu0 0.0
        %994 = vmatprep.subr.mxu0 0.0
        %995 = vmatpush2.msra.mxu0 0.0
        %996 = vmatprep.subr.mxu0 0.0
        %997 = vmatpush2.msra.mxu0 0.0
        %998 = vmatprep.subr.mxu0 0.0
        %999 = vmatpush2.msra.mxu0 0.0
        %1000 = vmatprep.subr.mxu0 0.0
        %1001 = vmatpush2.msra.mxu0 0.0
        %1002 = vmatprep.subr.mxu0 0.0
        %1003 = vmatpush2.msra.mxu0 0.0
        %1004 = vmatprep.mubr.f32.mxu0 0.0
        %1005 = vmatmul.mubr.f32.gmra.mxu0 %v938
        %v1006 = vpop.f32.mrf.mxu0
        %v1007 = vadd.f32 0.0, %v1006
        %v1008 = vpop.f32.mrf.mxu0
        %1009 = vdwg.mxu0
        %v1010 = vld [vmem:[#allocation15 + $0x8] sm:$0xff]
        %v1012 = vsel %vm680, %v1007, 0
        %1014 = vmatprep.subr.mxu0 0.0
        %1015 = vmatpush1.msra.mxu0 0.0
        %1016 = vmatprep.subr.mxu0 0.0
        %1017 = vmatpush1.msra.mxu0 0.0
        %1018 = vmatprep.subr.mxu0 0.0
        %1019 = vmatpush1.msra.mxu0 0.0
        %1020 = vmatprep.subr.mxu0 0.0
        %1021 = vmatpush1.msra.mxu0 0.0
        %1022 = vmatprep.subr.mxu0 0.0
        %1023 = vmatpush1.msra.mxu0 0.0
        %1024 = vmatprep.subr.mxu0 0.0
        %1025 = vmatpush1.msra.mxu0 0.0
        %1026 = vmatprep.subr.mxu0 0.0
        %1027 = vmatpush1.msra.mxu0 0.0
        %1028 = vmatprep.subr.mxu0 0.0
        %1029 = vmatpush1.msra.mxu0 0.0
        %1030 = vmatprep.subr.mxu0 0.0
        %1031 = vmatpush1.msra.mxu0 0.0
        %1032 = vmatprep.subr.mxu0 0.0
        %1033 = vmatpush1.msra.mxu0 0.0
        %1034 = vmatprep.subr.mxu0 0.0
        %1035 = vmatpush1.msra.mxu0 0.0
        %1036 = vmatprep.subr.mxu0 0.0
        %1037 = vmatpush1.msra.mxu0 0.0
        %1038 = vmatprep.subr.mxu0 0.0
        %1039 = vmatpush1.msra.mxu0 0.0
        %1040 = vmatprep.subr.mxu0 0.0
        %1041 = vmatpush1.msra.mxu0 0.0
        %1042 = vmatprep.subr.mxu0 0.0
        %1043 = vmatpush1.msra.mxu0 0.0
        %1044 = vmatprep.subr.mxu0 0.0
        %1045 = vmatpush1.msra.mxu0 %v1010
        %1046 = vmatprep.subr.mxu0 0.0
        %1047 = vmatpush2.msra.mxu0 0.0
        %1048 = vmatprep.subr.mxu0 0.0
        %1049 = vmatpush2.msra.mxu0 0.0
        %1050 = vmatprep.subr.mxu0 0.0
        %1051 = vmatpush2.msra.mxu0 0.0
        %1052 = vmatprep.subr.mxu0 0.0
        %1053 = vmatpush2.msra.mxu0 0.0
        %1054 = vmatprep.subr.mxu0 0.0
        %1055 = vmatpush2.msra.mxu0 0.0
        %1056 = vmatprep.subr.mxu0 0.0
        %1057 = vmatpush2.msra.mxu0 0.0
        %1058 = vmatprep.subr.mxu0 0.0
        %1059 = vmatpush2.msra.mxu0 0.0
        %1060 = vmatprep.subr.mxu0 0.0
        %1061 = vmatpush2.msra.mxu0 0.0
        %1062 = vmatprep.subr.mxu0 0.0
        %1063 = vmatpush2.msra.mxu0 0.0
        %1064 = vmatprep.subr.mxu0 0.0
        %1065 = vmatpush2.msra.mxu0 0.0
        %1066 = vmatprep.subr.mxu0 0.0
        %1067 = vmatpush2.msra.mxu0 0.0
        %1068 = vmatprep.subr.mxu0 0.0
        %1069 = vmatpush2.msra.mxu0 0.0
        %1070 = vmatprep.subr.mxu0 0.0
        %1071 = vmatpush2.msra.mxu0 0.0
        %1072 = vmatprep.subr.mxu0 0.0
        %1073 = vmatpush2.msra.mxu0 0.0
        %1074 = vmatprep.subr.mxu0 0.0
        %1075 = vmatpush2.msra.mxu0 0.0
        %1076 = vmatprep.subr.mxu0 0.0
        %1077 = vmatpush2.msra.mxu0 0.0
        %1078 = vmatprep.mubr.f32.mxu0 0.0
        %1079 = vmatmul.mubr.f32.gmra.mxu0 %v1012
        %v1080 = vpop.f32.mrf.mxu0
        %v1081 = vadd.f32 0.0, %v1080
        %v1082 = vpop.f32.mrf.mxu0
        %1083 = vdwg.mxu0
        %v1085 = vsel %vm680, %v839, 0
        %1087 = vmatprep.subr.mxu0 0.0
        %1088 = vmatpush1.msra.mxu0 0.0
        %1089 = vmatprep.subr.mxu0 0.0
        %1090 = vmatpush1.msra.mxu0 0.0
        %1091 = vmatprep.subr.mxu0 0.0
        %1092 = vmatpush1.msra.mxu0 0.0
        %1093 = vmatprep.subr.mxu0 0.0
        %1094 = vmatpush1.msra.mxu0 0.0
        %1095 = vmatprep.subr.mxu0 0.0
        %1096 = vmatpush1.msra.mxu0 0.0
        %1097 = vmatprep.subr.mxu0 0.0
        %1098 = vmatpush1.msra.mxu0 0.0
        %1099 = vmatprep.subr.mxu0 0.0
        %1100 = vmatpush1.msra.mxu0 0.0
        %1101 = vmatprep.subr.mxu0 0.0
        %1102 = vmatpush1.msra.mxu0 0.0
        %1103 = vmatprep.subr.mxu0 0.0
        %1104 = vmatpush1.msra.mxu0 0.0
        %1105 = vmatprep.subr.mxu0 0.0
        %1106 = vmatpush1.msra.mxu0 0.0
        %1107 = vmatprep.subr.mxu0 0.0
        %1108 = vmatpush1.msra.mxu0 0.0
        %1109 = vmatprep.subr.mxu0 0.0
        %1110 = vmatpush1.msra.mxu0 0.0
        %1111 = vmatprep.subr.mxu0 0.0
        %1112 = vmatpush1.msra.mxu0 0.0
        %1113 = vmatprep.subr.mxu0 0.0
        %1114 = vmatpush1.msra.mxu0 0.0
        %1115 = vmatprep.subr.mxu0 0.0
        %1116 = vmatpush1.msra.mxu0 0.0
        %1117 = vmatprep.subr.mxu0 0.0
        %1118 = vmatpush1.msra.mxu0 %v842
        %1119 = vmatprep.subr.mxu0 0.0
        %1120 = vmatpush2.msra.mxu0 0.0
        %1121 = vmatprep.subr.mxu0 0.0
        %1122 = vmatpush2.msra.mxu0 0.0
        %1123 = vmatprep.subr.mxu0 0.0
        %1124 = vmatpush2.msra.mxu0 0.0
        %1125 = vmatprep.subr.mxu0 0.0
        %1126 = vmatpush2.msra.mxu0 0.0
        %1127 = vmatprep.subr.mxu0 0.0
        %1128 = vmatpush2.msra.mxu0 0.0
        %1129 = vmatprep.subr.mxu0 0.0
        %1130 = vmatpush2.msra.mxu0 0.0
        %1131 = vmatprep.subr.mxu0 0.0
        %1132 = vmatpush2.msra.mxu0 0.0
        %1133 = vmatprep.subr.mxu0 0.0
        %1134 = vmatpush2.msra.mxu0 0.0
        %1135 = vmatprep.subr.mxu0 0.0
        %1136 = vmatpush2.msra.mxu0 0.0
        %1137 = vmatprep.subr.mxu0 0.0
        %1138 = vmatpush2.msra.mxu0 0.0
        %1139 = vmatprep.subr.mxu0 0.0
        %1140 = vmatpush2.msra.mxu0 0.0
        %1141 = vmatprep.subr.mxu0 0.0
        %1142 = vmatpush2.msra.mxu0 0.0
        %1143 = vmatprep.subr.mxu0 0.0
        %1144 = vmatpush2.msra.mxu0 0.0
        %1145 = vmatprep.subr.mxu0 0.0
        %1146 = vmatpush2.msra.mxu0 0.0
        %1147 = vmatprep.subr.mxu0 0.0
        %1148 = vmatpush2.msra.mxu0 0.0
        %1149 = vmatprep.subr.mxu0 0.0
        %1150 = vmatpush2.msra.mxu0 0.0
        %1151 = vmatprep.mubr.f32.mxu0 0.0
        %1152 = vmatmul.mubr.f32.gmra.mxu0 %v1085
        %v1153 = vpop.f32.mrf.mxu0
        %v1154 = vadd.f32 %v1081, %v1153
        %v1155 = vpop.f32.mrf.mxu0
        %1156 = vdwg.mxu0
        %1157 = vrot.lane.b32.xlu0 %v522, 112
        %v1158 = vpop.permute.xlu0 %1157
        %1159 = vrot.lane.b32.xlu0 %v596, 112
        %v1160 = vpop.permute.xlu0 %1159
        %v1161 = vsel %vm680, %v1158, 0
        %v1163 = vsel %vm680, %v1160, 0
        %1165 = vmatprep.subr.mxu0 0.0
        %1166 = vmatpush1.xpose.msra.mxu0 0.0
        %1167 = vmatprep.subr.mxu0 0.0
        %1168 = vmatpush1.xpose.msra.mxu0 0.0
        %1169 = vmatprep.subr.mxu0 0.0
        %1170 = vmatpush1.xpose.msra.mxu0 0.0
        %1171 = vmatprep.subr.mxu0 0.0
        %1172 = vmatpush1.xpose.msra.mxu0 0.0
        %1173 = vmatprep.subr.mxu0 0.0
        %1174 = vmatpush1.xpose.msra.mxu0 0.0
        %1175 = vmatprep.subr.mxu0 0.0
        %1176 = vmatpush1.xpose.msra.mxu0 0.0
        %1177 = vmatprep.subr.mxu0 0.0
        %1178 = vmatpush1.xpose.msra.mxu0 0.0
        %1179 = vmatprep.subr.mxu0 0.0
        %1180 = vmatpush1.xpose.msra.mxu0 0.0
        %1181 = vmatprep.subr.mxu0 0.0
        %1182 = vmatpush1.xpose.msra.mxu0 0.0
        %1183 = vmatprep.subr.mxu0 0.0
        %1184 = vmatpush1.xpose.msra.mxu0 0.0
        %1185 = vmatprep.subr.mxu0 0.0
        %1186 = vmatpush1.xpose.msra.mxu0 0.0
        %1187 = vmatprep.subr.mxu0 0.0
        %1188 = vmatpush1.xpose.msra.mxu0 0.0
        %1189 = vmatprep.subr.mxu0 0.0
        %1190 = vmatpush1.xpose.msra.mxu0 0.0
        %1191 = vmatprep.subr.mxu0 0.0
        %1192 = vmatpush1.xpose.msra.mxu0 0.0
        %1193 = vmatprep.subr.mxu0 0.0
        %1194 = vmatpush1.xpose.msra.mxu0 0.0
        %1195 = vmatprep.subr.mxu0 0.0
        %1196 = vmatpush1.xpose.msra.mxu0 %v1163
        %1197 = vmatprep.subr.mxu0 0.0
        %1198 = vmatpush2.xpose.msra.mxu0 0.0
        %1199 = vmatprep.subr.mxu0 0.0
        %1200 = vmatpush2.xpose.msra.mxu0 0.0
        %1201 = vmatprep.subr.mxu0 0.0
        %1202 = vmatpush2.xpose.msra.mxu0 0.0
        %1203 = vmatprep.subr.mxu0 0.0
        %1204 = vmatpush2.xpose.msra.mxu0 0.0
        %1205 = vmatprep.subr.mxu0 0.0
        %1206 = vmatpush2.xpose.msra.mxu0 0.0
        %1207 = vmatprep.subr.mxu0 0.0
        %1208 = vmatpush2.xpose.msra.mxu0 0.0
        %1209 = vmatprep.subr.mxu0 0.0
        %1210 = vmatpush2.xpose.msra.mxu0 0.0
        %1211 = vmatprep.subr.mxu0 0.0
        %1212 = vmatpush2.xpose.msra.mxu0 0.0
        %1213 = vmatprep.subr.mxu0 0.0
        %1214 = vmatpush2.xpose.msra.mxu0 0.0
        %1215 = vmatprep.subr.mxu0 0.0
        %1216 = vmatpush2.xpose.msra.mxu0 0.0
        %1217 = vmatprep.subr.mxu0 0.0
        %1218 = vmatpush2.xpose.msra.mxu0 0.0
        %1219 = vmatprep.subr.mxu0 0.0
        %1220 = vmatpush2.xpose.msra.mxu0 0.0
        %1221 = vmatprep.subr.mxu0 0.0
        %1222 = vmatpush2.xpose.msra.mxu0 0.0
        %1223 = vmatprep.subr.mxu0 0.0
        %1224 = vmatpush2.xpose.msra.mxu0 0.0
        %1225 = vmatprep.subr.mxu0 0.0
        %1226 = vmatpush2.xpose.msra.mxu0 0.0
        %1227 = vmatprep.subr.mxu0 0.0
        %1228 = vmatpush2.xpose.msra.mxu0 0.0
        %1229 = vmatprep.mubr.f32.mxu0 0.0
        %1230 = vmatmul.mubr.f32.gmra.mxu0 %v1161
        %v1231 = vpop.f32.mrf.mxu0
        %v1232 = vadd.f32 0.0, %v1231
        %v1233 = vpop.f32.mrf.mxu0
        %1234 = vdwg.mxu0
        %v1235 = vsel %vm679, %v1232, -1000000.0
        %v1236 = vsel %vm680, %v1235, -inf
        %1237 = vmax.xlane.f32.xlu0 %v1236
        %v1238 = vpop.xlane.xlu0 %1237
        %v1239 = vsub.f32 %v1235, %v1238
        %v1240 = vmul.f32 %v1239, 1.442695
        %v1241 = vpow.pop %v1240
        %v1242 = vsel %vm680, %v1241, 0.0
        %1243 = vadd.xlane.f32.xlu0 %v1242
        %v1244 = vpop.xlane.xlu0 %1243
        %v1245 = vrcp.pop %v1244
        %v1246 = vmul.f32 %v1241, %v1245
        %1247 = vrot.lane.b32.xlu0 %v672, 112
        %v1248 = vpop.permute.xlu0 %1247
        %v1251 = vsel %vm680, %v1246, 0
        %1253 = vmatprep.subr.mxu0 0.0
        %1254 = vmatpush1.msra.mxu0 0.0
        %1255 = vmatprep.subr.mxu0 0.0
        %1256 = vmatpush1.msra.mxu0 0.0
        %1257 = vmatprep.subr.mxu0 0.0
        %1258 = vmatpush1.msra.mxu0 0.0
        %1259 = vmatprep.subr.mxu0 0.0
        %1260 = vmatpush1.msra.mxu0 0.0
        %1261 = vmatprep.subr.mxu0 0.0
        %1262 = vmatpush1.msra.mxu0 0.0
        %1263 = vmatprep.subr.mxu0 0.0
        %1264 = vmatpush1.msra.mxu0 0.0
        %1265 = vmatprep.subr.mxu0 0.0
        %1266 = vmatpush1.msra.mxu0 0.0
        %1267 = vmatprep.subr.mxu0 0.0
        %1268 = vmatpush1.msra.mxu0 0.0
        %1269 = vmatprep.subr.mxu0 0.0
        %1270 = vmatpush1.msra.mxu0 0.0
        %1271 = vmatprep.subr.mxu0 0.0
        %1272 = vmatpush1.msra.mxu0 0.0
        %1273 = vmatprep.subr.mxu0 0.0
        %1274 = vmatpush1.msra.mxu0 0.0
        %1275 = vmatprep.subr.mxu0 0.0
        %1276 = vmatpush1.msra.mxu0 0.0
        %1277 = vmatprep.subr.mxu0 0.0
        %1278 = vmatpush1.msra.mxu0 0.0
        %1279 = vmatprep.subr.mxu0 0.0
        %1280 = vmatpush1.msra.mxu0 0.0
        %1281 = vmatprep.subr.mxu0 0.0
        %1282 = vmatpush1.msra.mxu0 0.0
        %1283 = vmatprep.subr.mxu0 0.0
        %1284 = vmatpush1.msra.mxu0 %v1248
        %1285 = vmatprep.subr.mxu0 0.0
        %1286 = vmatpush2.msra.mxu0 0.0
        %1287 = vmatprep.subr.mxu0 0.0
        %1288 = vmatpush2.msra.mxu0 0.0
        %1289 = vmatprep.subr.mxu0 0.0
        %1290 = vmatpush2.msra.mxu0 0.0
        %1291 = vmatprep.subr.mxu0 0.0
        %1292 = vmatpush2.msra.mxu0 0.0
        %1293 = vmatprep.subr.mxu0 0.0
        %1294 = vmatpush2.msra.mxu0 0.0
        %1295 = vmatprep.subr.mxu0 0.0
        %1296 = vmatpush2.msra.mxu0 0.0
        %1297 = vmatprep.subr.mxu0 0.0
        %1298 = vmatpush2.msra.mxu0 0.0
        %1299 = vmatprep.subr.mxu0 0.0
        %1300 = vmatpush2.msra.mxu0 0.0
        %1301 = vmatprep.subr.mxu0 0.0
        %1302 = vmatpush2.msra.mxu0 0.0
        %1303 = vmatprep.subr.mxu0 0.0
        %1304 = vmatpush2.msra.mxu0 0.0
        %1305 = vmatprep.subr.mxu0 0.0
        %1306 = vmatpush2.msra.mxu0 0.0
        %1307 = vmatprep.subr.mxu0 0.0
        %1308 = vmatpush2.msra.mxu0 0.0
        %1309 = vmatprep.subr.mxu0 0.0
        %1310 = vmatpush2.msra.mxu0 0.0
        %1311 = vmatprep.subr.mxu0 0.0
        %1312 = vmatpush2.msra.mxu0 0.0
        %1313 = vmatprep.subr.mxu0 0.0
        %1314 = vmatpush2.msra.mxu0 0.0
        %1315 = vmatprep.subr.mxu0 0.0
        %1316 = vmatpush2.msra.mxu0 0.0
        %1317 = vmatprep.mubr.f32.mxu0 0.0
        %1318 = vmatmul.mubr.f32.gmra.mxu0 %v1251
        %v1319 = vpop.f32.mrf.mxu0
        %v1320 = vadd.f32 0.0, %v1319
        %v1321 = vpop.f32.mrf.mxu0
        %1322 = vdwg.mxu0
        %v1323 = vld [vmem:[#allocation15 + $0x10] sm:$0xff]
        %v1325 = vsel %vm680, %v1320, 0
        %1327 = vmatprep.subr.mxu0 0.0
        %1328 = vmatpush1.msra.mxu0 0.0
        %1329 = vmatprep.subr.mxu0 0.0
        %1330 = vmatpush1.msra.mxu0 0.0
        %1331 = vmatprep.subr.mxu0 0.0
        %1332 = vmatpush1.msra.mxu0 0.0
        %1333 = vmatprep.subr.mxu0 0.0
        %1334 = vmatpush1.msra.mxu0 0.0
        %1335 = vmatprep.subr.mxu0 0.0
        %1336 = vmatpush1.msra.mxu0 0.0
        %1337 = vmatprep.subr.mxu0 0.0
        %1338 = vmatpush1.msra.mxu0 0.0
        %1339 = vmatprep.subr.mxu0 0.0
        %1340 = vmatpush1.msra.mxu0 0.0
        %1341 = vmatprep.subr.mxu0 0.0
        %1342 = vmatpush1.msra.mxu0 0.0
        %1343 = vmatprep.subr.mxu0 0.0
        %1344 = vmatpush1.msra.mxu0 0.0
        %1345 = vmatprep.subr.mxu0 0.0
        %1346 = vmatpush1.msra.mxu0 0.0
        %1347 = vmatprep.subr.mxu0 0.0
        %1348 = vmatpush1.msra.mxu0 0.0
        %1349 = vmatprep.subr.mxu0 0.0
        %1350 = vmatpush1.msra.mxu0 0.0
        %1351 = vmatprep.subr.mxu0 0.0
        %1352 = vmatpush1.msra.mxu0 0.0
        %1353 = vmatprep.subr.mxu0 0.0
        %1354 = vmatpush1.msra.mxu0 0.0
        %1355 = vmatprep.subr.mxu0 0.0
        %1356 = vmatpush1.msra.mxu0 0.0
        %1357 = vmatprep.subr.mxu0 0.0
        %1358 = vmatpush1.msra.mxu0 %v1323
        %1359 = vmatprep.subr.mxu0 0.0
        %1360 = vmatpush2.msra.mxu0 0.0
        %1361 = vmatprep.subr.mxu0 0.0
        %1362 = vmatpush2.msra.mxu0 0.0
        %1363 = vmatprep.subr.mxu0 0.0
        %1364 = vmatpush2.msra.mxu0 0.0
        %1365 = vmatprep.subr.mxu0 0.0
        %1366 = vmatpush2.msra.mxu0 0.0
        %1367 = vmatprep.subr.mxu0 0.0
        %1368 = vmatpush2.msra.mxu0 0.0
        %1369 = vmatprep.subr.mxu0 0.0
        %1370 = vmatpush2.msra.mxu0 0.0
        %1371 = vmatprep.subr.mxu0 0.0
        %1372 = vmatpush2.msra.mxu0 0.0
        %1373 = vmatprep.subr.mxu0 0.0
        %1374 = vmatpush2.msra.mxu0 0.0
        %1375 = vmatprep.subr.mxu0 0.0
        %1376 = vmatpush2.msra.mxu0 0.0
        %1377 = vmatprep.subr.mxu0 0.0
        %1378 = vmatpush2.msra.mxu0 0.0
        %1379 = vmatprep.subr.mxu0 0.0
        %1380 = vmatpush2.msra.mxu0 0.0
        %1381 = vmatprep.subr.mxu0 0.0
        %1382 = vmatpush2.msra.mxu0 0.0
        %1383 = vmatprep.subr.mxu0 0.0
        %1384 = vmatpush2.msra.mxu0 0.0
        %1385 = vmatprep.subr.mxu0 0.0
        %1386 = vmatpush2.msra.mxu0 0.0
        %1387 = vmatprep.subr.mxu0 0.0
        %1388 = vmatpush2.msra.mxu0 0.0
        %1389 = vmatprep.subr.mxu0 0.0
        %1390 = vmatpush2.msra.mxu0 0.0
        %1391 = vmatprep.mubr.f32.mxu0 0.0
        %1392 = vmatmul.mubr.f32.gmra.mxu0 %v1325
        %v1393 = vpop.f32.mrf.mxu0
        %v1394 = vadd.f32 0.0, %v1393
        %v1395 = vpop.f32.mrf.mxu0
        %1396 = vdwg.mxu0
        %v1397 = vadd.f32 %v1154, %v1394
        %1398 = vrot.lane.b32.xlu0 %v522, 104
        %v1399 = vpop.permute.xlu0 %1398
        %1400 = vrot.lane.b32.xlu0 %v596, 104
        %v1401 = vpop.permute.xlu0 %1400
        %v1402 = vsel %vm680, %v1399, 0
        %v1404 = vsel %vm680, %v1401, 0
        %1406 = vmatprep.subr.mxu0 0.0
        %1407 = vmatpush1.xpose.msra.mxu0 0.0
        %1408 = vmatprep.subr.mxu0 0.0
        %1409 = vmatpush1.xpose.msra.mxu0 0.0
        %1410 = vmatprep.subr.mxu0 0.0
        %1411 = vmatpush1.xpose.msra.mxu0 0.0
        %1412 = vmatprep.subr.mxu0 0.0
        %1413 = vmatpush1.xpose.msra.mxu0 0.0
        %1414 = vmatprep.subr.mxu0 0.0
        %1415 = vmatpush1.xpose.msra.mxu0 0.0
        %1416 = vmatprep.subr.mxu0 0.0
        %1417 = vmatpush1.xpose.msra.mxu0 0.0
        %1418 = vmatprep.subr.mxu0 0.0
        %1419 = vmatpush1.xpose.msra.mxu0 0.0
        %1420 = vmatprep.subr.mxu0 0.0
        %1421 = vmatpush1.xpose.msra.mxu0 0.0
        %1422 = vmatprep.subr.mxu0 0.0
        %1423 = vmatpush1.xpose.msra.mxu0 0.0
        %1424 = vmatprep.subr.mxu0 0.0
        %1425 = vmatpush1.xpose.msra.mxu0 0.0
        %1426 = vmatprep.subr.mxu0 0.0
        %1427 = vmatpush1.xpose.msra.mxu0 0.0
        %1428 = vmatprep.subr.mxu0 0.0
        %1429 = vmatpush1.xpose.msra.mxu0 0.0
        %1430 = vmatprep.subr.mxu0 0.0
        %1431 = vmatpush1.xpose.msra.mxu0 0.0
        %1432 = vmatprep.subr.mxu0 0.0
        %1433 = vmatpush1.xpose.msra.mxu0 0.0
        %1434 = vmatprep.subr.mxu0 0.0
        %1435 = vmatpush1.xpose.msra.mxu0 0.0
        %1436 = vmatprep.subr.mxu0 0.0
        %1437 = vmatpush1.xpose.msra.mxu0 %v1404
        %1438 = vmatprep.subr.mxu0 0.0
        %1439 = vmatpush2.xpose.msra.mxu0 0.0
        %1440 = vmatprep.subr.mxu0 0.0
        %1441 = vmatpush2.xpose.msra.mxu0 0.0
        %1442 = vmatprep.subr.mxu0 0.0
        %1443 = vmatpush2.xpose.msra.mxu0 0.0
        %1444 = vmatprep.subr.mxu0 0.0
        %1445 = vmatpush2.xpose.msra.mxu0 0.0
        %1446 = vmatprep.subr.mxu0 0.0
        %1447 = vmatpush2.xpose.msra.mxu0 0.0
        %1448 = vmatprep.subr.mxu0 0.0
        %1449 = vmatpush2.xpose.msra.mxu0 0.0
        %1450 = vmatprep.subr.mxu0 0.0
        %1451 = vmatpush2.xpose.msra.mxu0 0.0
        %1452 = vmatprep.subr.mxu0 0.0
        %1453 = vmatpush2.xpose.msra.mxu0 0.0
        %1454 = vmatprep.subr.mxu0 0.0
        %1455 = vmatpush2.xpose.msra.mxu0 0.0
        %1456 = vmatprep.subr.mxu0 0.0
        %1457 = vmatpush2.xpose.msra.mxu0 0.0
        %1458 = vmatprep.subr.mxu0 0.0
        %1459 = vmatpush2.xpose.msra.mxu0 0.0
        %1460 = vmatprep.subr.mxu0 0.0
        %1461 = vmatpush2.xpose.msra.mxu0 0.0
        %1462 = vmatprep.subr.mxu0 0.0
        %1463 = vmatpush2.xpose.msra.mxu0 0.0
        %1464 = vmatprep.subr.mxu0 0.0
        %1465 = vmatpush2.xpose.msra.mxu0 0.0
        %1466 = vmatprep.subr.mxu0 0.0
        %1467 = vmatpush2.xpose.msra.mxu0 0.0
        %1468 = vmatprep.subr.mxu0 0.0
        %1469 = vmatpush2.xpose.msra.mxu0 0.0
        %1470 = vmatprep.mubr.f32.mxu0 0.0
        %1471 = vmatmul.mubr.f32.gmra.mxu0 %v1402
        %v1472 = vpop.f32.mrf.mxu0
        %v1473 = vadd.f32 0.0, %v1472
        %v1474 = vpop.f32.mrf.mxu0
        %1475 = vdwg.mxu0
        %v1476 = vsel %vm679, %v1473, -1000000.0
        %v1477 = vsel %vm680, %v1476, -inf
        %1478 = vmax.xlane.f32.xlu0 %v1477
        %v1479 = vpop.xlane.xlu0 %1478
        %v1480 = vsub.f32 %v1476, %v1479
        %v1481 = vmul.f32 %v1480, 1.442695
        %v1482 = vpow.pop %v1481
        %v1483 = vsel %vm680, %v1482, 0.0
        %1484 = vadd.xlane.f32.xlu0 %v1483
        %v1485 = vpop.xlane.xlu0 %1484
        %v1486 = vrcp.pop %v1485
        %v1487 = vmul.f32 %v1482, %v1486
        %1488 = vrot.lane.b32.xlu0 %v672, 104
        %v1489 = vpop.permute.xlu0 %1488
        %v1492 = vsel %vm680, %v1487, 0
        %1494 = vmatprep.subr.mxu0 0.0
        %1495 = vmatpush1.msra.mxu0 0.0
        %1496 = vmatprep.subr.mxu0 0.0
        %1497 = vmatpush1.msra.mxu0 0.0
        %1498 = vmatprep.subr.mxu0 0.0
        %1499 = vmatpush1.msra.mxu0 0.0
        %1500 = vmatprep.subr.mxu0 0.0
        %1501 = vmatpush1.msra.mxu0 0.0
        %1502 = vmatprep.subr.mxu0 0.0
        %1503 = vmatpush1.msra.mxu0 0.0
        %1504 = vmatprep.subr.mxu0 0.0
        %1505 = vmatpush1.msra.mxu0 0.0
        %1506 = vmatprep.subr.mxu0 0.0
        %1507 = vmatpush1.msra.mxu0 0.0
        %1508 = vmatprep.subr.mxu0 0.0
        %1509 = vmatpush1.msra.mxu0 0.0
        %1510 = vmatprep.subr.mxu0 0.0
        %1511 = vmatpush1.msra.mxu0 0.0
        %1512 = vmatprep.subr.mxu0 0.0
        %1513 = vmatpush1.msra.mxu0 0.0
        %1514 = vmatprep.subr.mxu0 0.0
        %1515 = vmatpush1.msra.mxu0 0.0
        %1516 = vmatprep.subr.mxu0 0.0
        %1517 = vmatpush1.msra.mxu0 0.0
        %1518 = vmatprep.subr.mxu0 0.0
        %1519 = vmatpush1.msra.mxu0 0.0
        %1520 = vmatprep.subr.mxu0 0.0
        %1521 = vmatpush1.msra.mxu0 0.0
        %1522 = vmatprep.subr.mxu0 0.0
        %1523 = vmatpush1.msra.mxu0 0.0
        %1524 = vmatprep.subr.mxu0 0.0
        %1525 = vmatpush1.msra.mxu0 %v1489
        %1526 = vmatprep.subr.mxu0 0.0
        %1527 = vmatpush2.msra.mxu0 0.0
        %1528 = vmatprep.subr.mxu0 0.0
        %1529 = vmatpush2.msra.mxu0 0.0
        %1530 = vmatprep.subr.mxu0 0.0
        %1531 = vmatpush2.msra.mxu0 0.0
        %1532 = vmatprep.subr.mxu0 0.0
        %1533 = vmatpush2.msra.mxu0 0.0
        %1534 = vmatprep.subr.mxu0 0.0
        %1535 = vmatpush2.msra.mxu0 0.0
        %1536 = vmatprep.subr.mxu0 0.0
        %1537 = vmatpush2.msra.mxu0 0.0
        %1538 = vmatprep.subr.mxu0 0.0
        %1539 = vmatpush2.msra.mxu0 0.0
        %1540 = vmatprep.subr.mxu0 0.0
        %1541 = vmatpush2.msra.mxu0 0.0
        %1542 = vmatprep.subr.mxu0 0.0
        %1543 = vmatpush2.msra.mxu0 0.0
        %1544 = vmatprep.subr.mxu0 0.0
        %1545 = vmatpush2.msra.mxu0 0.0
        %1546 = vmatprep.subr.mxu0 0.0
        %1547 = vmatpush2.msra.mxu0 0.0
        %1548 = vmatprep.subr.mxu0 0.0
        %1549 = vmatpush2.msra.mxu0 0.0
        %1550 = vmatprep.subr.mxu0 0.0
        %1551 = vmatpush2.msra.mxu0 0.0
        %1552 = vmatprep.subr.mxu0 0.0
        %1553 = vmatpush2.msra.mxu0 0.0
        %1554 = vmatprep.subr.mxu0 0.0
        %1555 = vmatpush2.msra.mxu0 0.0
        %1556 = vmatprep.subr.mxu0 0.0
        %1557 = vmatpush2.msra.mxu0 0.0
        %1558 = vmatprep.mubr.f32.mxu0 0.0
        %1559 = vmatmul.mubr.f32.gmra.mxu0 %v1492
        %v1560 = vpop.f32.mrf.mxu0
        %v1561 = vadd.f32 0.0, %v1560
        %v1562 = vpop.f32.mrf.mxu0
        %1563 = vdwg.mxu0
        %v1564 = vld [vmem:[#allocation15 + $0x18] sm:$0xff]
        %v1566 = vsel %vm680, %v1561, 0
        %1568 = vmatprep.subr.mxu0 0.0
        %1569 = vmatpush1.msra.mxu0 0.0
        %1570 = vmatprep.subr.mxu0 0.0
        %1571 = vmatpush1.msra.mxu0 0.0
        %1572 = vmatprep.subr.mxu0 0.0
        %1573 = vmatpush1.msra.mxu0 0.0
        %1574 = vmatprep.subr.mxu0 0.0
        %1575 = vmatpush1.msra.mxu0 0.0
        %1576 = vmatprep.subr.mxu0 0.0
        %1577 = vmatpush1.msra.mxu0 0.0
        %1578 = vmatprep.subr.mxu0 0.0
        %1579 = vmatpush1.msra.mxu0 0.0
        %1580 = vmatprep.subr.mxu0 0.0
        %1581 = vmatpush1.msra.mxu0 0.0
        %1582 = vmatprep.subr.mxu0 0.0
        %1583 = vmatpush1.msra.mxu0 0.0
        %1584 = vmatprep.subr.mxu0 0.0
        %1585 = vmatpush1.msra.mxu0 0.0
        %1586 = vmatprep.subr.mxu0 0.0
        %1587 = vmatpush1.msra.mxu0 0.0
        %1588 = vmatprep.subr.mxu0 0.0
        %1589 = vmatpush1.msra.mxu0 0.0
        %1590 = vmatprep.subr.mxu0 0.0
        %1591 = vmatpush1.msra.mxu0 0.0
        %1592 = vmatprep.subr.mxu0 0.0
        %1593 = vmatpush1.msra.mxu0 0.0
        %1594 = vmatprep.subr.mxu0 0.0
        %1595 = vmatpush1.msra.mxu0 0.0
        %1596 = vmatprep.subr.mxu0 0.0
        %1597 = vmatpush1.msra.mxu0 0.0
        %1598 = vmatprep.subr.mxu0 0.0
        %1599 = vmatpush1.msra.mxu0 %v1564
        %1600 = vmatprep.subr.mxu0 0.0
        %1601 = vmatpush2.msra.mxu0 0.0
        %1602 = vmatprep.subr.mxu0 0.0
        %1603 = vmatpush2.msra.mxu0 0.0
        %1604 = vmatprep.subr.mxu0 0.0
        %1605 = vmatpush2.msra.mxu0 0.0
        %1606 = vmatprep.subr.mxu0 0.0
        %1607 = vmatpush2.msra.mxu0 0.0
        %1608 = vmatprep.subr.mxu0 0.0
        %1609 = vmatpush2.msra.mxu0 0.0
        %1610 = vmatprep.subr.mxu0 0.0
        %1611 = vmatpush2.msra.mxu0 0.0
        %1612 = vmatprep.subr.mxu0 0.0
        %1613 = vmatpush2.msra.mxu0 0.0
        %1614 = vmatprep.subr.mxu0 0.0
        %1615 = vmatpush2.msra.mxu0 0.0
        %1616 = vmatprep.subr.mxu0 0.0
        %1617 = vmatpush2.msra.mxu0 0.0
        %1618 = vmatprep.subr.mxu0 0.0
        %1619 = vmatpush2.msra.mxu0 0.0
        %1620 = vmatprep.subr.mxu0 0.0
        %1621 = vmatpush2.msra.mxu0 0.0
        %1622 = vmatprep.subr.mxu0 0.0
        %1623 = vmatpush2.msra.mxu0 0.0
        %1624 = vmatprep.subr.mxu0 0.0
        %1625 = vmatpush2.msra.mxu0 0.0
        %1626 = vmatprep.subr.mxu0 0.0
        %1627 = vmatpush2.msra.mxu0 0.0
        %1628 = vmatprep.subr.mxu0 0.0
        %1629 = vmatpush2.msra.mxu0 0.0
        %1630 = vmatprep.subr.mxu0 0.0
        %1631 = vmatpush2.msra.mxu0 0.0
        %1632 = vmatprep.mubr.f32.mxu0 0.0
        %1633 = vmatmul.mubr.f32.gmra.mxu0 %v1566
        %v1634 = vpop.f32.mrf.mxu0
        %v1635 = vadd.f32 0.0, %v1634
        %v1636 = vpop.f32.mrf.mxu0
        %1637 = vdwg.mxu0
        %v1638 = vadd.f32 %v1397, %v1635
        %vm1639 = vcmask 261120
        %1640 = vst.msk [vmem:[%s444] sm:$0xff] %vm1639, %v1638
        %s1641 = sand.u32 %s220, 1
        %s1642 = scalar_lea.sflag [#allocation6], %s1641
        %s1643 = sand.u32 %s220, 1
        %s1644 = smul.addr %s1643, 8
        %s1645 = scalar_lea.vmem [#allocation16], %s1644
        // Predicated region
        $region77: #{tpu_custom_call.1} parent=47 // pred_check
          %p1646 = pneg %p230
        $region78: #{tpu_custom_call.1} parent=47 // pred_check_branch
          %1648 = sbr.rel (%p1646) target = $region80
        $region79: #{tpu_custom_call.1} parent=47 // pred_region
          %s1650 = ssub.s32 128, 128
          %1651 = vsyncadd %s1642, %s1650
          %s1652 = sadd.s32 %s39, %s38
          %s1653 = smul.addr %s1652, 128
          %s1654 = scalar_lea.hbm %s8, %s1653
          %s1656 = sshll.u32 %s1645, 4
          %s1657 = int_to_ptr.vmem [resolvable:$true] %s1656
          %1659 = dma.vmem_to_hbm [thread:$0]  %s1657, 128, %s1654, %s1642
        $region80: #{tpu_custom_call.1} parent=47 // pred_fallthru
          _
      $region48: #{tpu_custom_call.1} parent=5 // pred_fallthru
        _
      %p1660 = scmp.le.s32.totalorder 2, %s29
      // Predicated region
      $region81: #{tpu_custom_call.1} parent=5 // pred_check
        %p1661 = pneg %p1660
      $region82: #{tpu_custom_call.1} parent=5 // pred_check_branch
        %1663 = sbr.rel (%p1661) target = $region84
      $region83: #{tpu_custom_call.1} parent=5 // pred_region
        %s1664 = ssub.s32 %s29, 2
        // Predicated region
        $region85: #{tpu_custom_call.1} parent=83 // pred_check
          %p1665 = pneg %p236
        $region86: #{tpu_custom_call.1} parent=83 // pred_check_branch
          %1667 = sbr.rel (%p1665) target = $region88
        $region87: #{tpu_custom_call.1} parent=83 // pred_region
          %s1668 = sand.u32 %s221, 1
          %s1669 = scalar_lea.sflag [#allocation6], %s1668
          %s1670 = sand.u32 %s221, 1
          %s1671 = smul.addr %s1670, 8
          %s1672 = scalar_lea.vmem [#allocation16], %s1671
          %1673 = dma.done %s1669, 128
        $region88: #{tpu_custom_call.1} parent=83 // pred_fallthru
          _
      $region84: #{tpu_custom_call.1} parent=5 // pred_fallthru
        _
    $region6: #{tpu_custom_call.1} parent=1 // loop_footer
      %s33 = sadd.s32 1, %s29
    $region7: #{tpu_custom_call.1} parent=1 // loop_footer_branch
      %28 = sbr.rel target = $region3
    $region8: #{tpu_custom_call.1} parent=1 // loop_exit
      _
    %1674 = vsyncpa [#allocation5], 1
    %s1675 = scalar_lea.sflag [#allocation5], 1
    %1676 = vsyncpa %s1675, 1
    %1677 = vsyncpa [#allocation8], 1
    %s1678 = scalar_lea.sflag [#allocation8], 1
    %1679 = vsyncpa %s1678, 1
    %1680 = vsyncpa [#allocation11], 1
    %1681 = vsyncpa [#allocation14], 1
    %1682 = vsyncpa [#allocation6], 1
    %s1683 = scalar_lea.sflag [#allocation6], 1
    %1684 = vsyncpa %s1683, 1

</llo_original>
